<compile_context>
chip_gen: v6e
topology: v6e:2x2x1
jax: 0.10.0
libtpu: 0.0.40
codegen_flags: <defaults>
</compile_context>

<pallas_src>
import functools
import math

import jax
import jax.numpy as jnp
from jax.experimental import pallas as pl
from jax.experimental.pallas import tpu as pltpu


# ----------------------------------------------------------------------------
# Pallas kernel: one grid step = one direction x one chunk of Tc timesteps.
# ----------------------------------------------------------------------------
def _lstm_dir_chunk_kernel(g_ref,      # (Tc, B, 4H) precomputed gates for this dir/chunk
                           whh_ref,    # (H, 4H)     W_hh^T for this direction (resident)
                           hs_ref,     # (Tc, B, H)  hidden-sequence chunk (natural time order)
                           hfin_ref,   # (B, H) f32  final h, doubles as the h carry
                           cfin_ref,   # (B, H) f32  final c, doubles as the c carry
                           *, seq_len, tc, unroll):
    d = pl.program_id(0)            # direction: 0 = forward, 1 = reverse
    c = pl.program_id(1)            # time-chunk index (processing order)
    nc = pl.num_programs(1)
    H = whh_ref.shape[0]

    @pl.when(c == 0)
    def _():
        hfin_ref[...] = jnp.zeros_like(hfin_ref)
        cfin_ref[...] = jnp.zeros_like(cfin_ref)

    whh = whh_ref[...]                               # (H, 4H), compute dtype
    # Time block covered by this view: c for fwd, nc-1-c for rev.
    blk = c + d * (nc - 1 - 2 * c)
    base = blk * tc

    def step(s, carry):
        h_prev, c_prev = carry                       # (B, H) f32 each
        # Row inside the chunk: s for fwd, tc-1-s for rev (so the reverse
        # direction walks padded time T_pad-1 .. 0 as the grid advances).
        t = s + d * (tc - 1 - 2 * s)
        valid = base + t < seq_len                   # tail-padding mask

        # Recurrent projection (MXU), f32 accumulation.
        pre = jnp.dot(h_prev.astype(whh.dtype), whh,
                      preferred_element_type=jnp.float32)
        pre = pre + g_ref[t].astype(jnp.float32)     # (B, 4H)

        # Gate order was permuted to (i, f, o, g) in the wrapper:
        # one sigmoid over the contiguous 3H slab, one tanh over the last H.
        sig = jax.nn.sigmoid(pre[:, :3 * H])
        g_gate = jnp.tanh(pre[:, 3 * H:])
        i_g = sig[:, 0 * H:1 * H]
        f_g = sig[:, 1 * H:2 * H]
        o_g = sig[:, 2 * H:3 * H]

        c_new = f_g * c_prev + i_g * g_gate
        h_new = o_g * jnp.tanh(c_new)
        # Masked carry update for padded tail timesteps (keeps final h/c exact).
        c_new = jnp.where(valid, c_new, c_prev)
        h_new = jnp.where(valid, h_new, h_prev)

        hs_ref[t] = h_new.astype(hs_ref.dtype)
        return h_new, c_new

    h_fin, c_fin = jax.lax.fori_loop(0, tc, step,
                                     (hfin_ref[...], cfin_ref[...]),
                                     unroll=unroll)
    hfin_ref[...] = h_fin
    cfin_ref[...] = c_fin


# ----------------------------------------------------------------------------
# VMEM-budget driven sizing
# ----------------------------------------------------------------------------
def _vmem_capacity_bytes():
    try:
        return int(pltpu.get_tpu_info().vmem_capacity_bytes)
    except Exception:
        return 64 * 1024 * 1024        # conservative (v7x per-TensorCore)


def _pick_chunk(T, B, H, compute_dtype, max_chunk=None):
    """Largest Tc that fits the per-chunk VMEM budget (capped at T and 256)."""
    if max_chunk is not None:
        return max(1, min(int(max_chunk), T))
    ib = jnp.dtype(compute_dtype).itemsize
    budget = int(0.7 * _vmem_capacity_bytes())
    fixed = 2 * H * 4 * H * ib              # resident W_hh (worst case: 2 bufs)
    fixed += 2 * 2 * B * H * 4              # f32 h/c carry outputs
    per_t = 2 * B * 4 * H * ib              # gate input block, double-buffered
    per_t += 2 * B * H * 4                  # hseq output block (f32 worst case)
    tc = (budget - fixed) // max(per_t, 1)
    return int(max(1, min(tc, T, 256)))


def _pick_unroll(tc, B, H):
    # The carry chain is serial: full unroll only pays when the per-step
    # working set is small; otherwise deep unroll just inflates vreg pressure.
    if tc * B * H <= (1 << 16):
        return tc
    return min(tc, 4)


def _vmem_limit_bytes(tc, B, H, in_dtype, out_dtype):
    ib = jnp.dtype(in_dtype).itemsize
    ob = jnp.dtype(out_dtype).itemsize
    need = (2 * H * 4 * H * ib
            + 2 * tc * B * 4 * H * ib
            + 2 * tc * B * H * ob
            + 4 * 2 * B * H * 4)
    cap = _vmem_capacity_bytes()
    return int(min(int(0.9 * cap), max(2 * need, 32 * 1024 * 1024)))


_WHH_SINGLE_BUFFER_BYTES = 2 * 1024 * 1024


def _whh_block_spec(H, itemsize):
    idx = lambda d, c: (d, 0, 0)
    shape = (None, H, 4 * H)
    # The W_hh block index is constant along the time axis, so the default
    # second pipeline buffer is pure VMEM waste; single-buffer it once it is
    # big enough to matter (mandatory at production sizes on v7x's 64 MiB).
    if H * 4 * H * itemsize >= _WHH_SINGLE_BUFFER_BYTES:
        try:
            return pl.BlockSpec(shape, idx, pipeline_mode=pl.Buffered(1))
        except Exception:
            pass
    return pl.BlockSpec(shape, idx)


# ----------------------------------------------------------------------------
# One bidirectional layer = one pallas_call, grid = (2 directions, nc chunks)
# ----------------------------------------------------------------------------
def _run_bidir_layer(gates, whh, *, seq_len, tc, hseq_dtype):
    """gates: (2, T_pad, B, 4H) precomputed input projections (natural time order).
    whh: (2, H, 4H) stacked W_hh^T.  Returns (hseq (2,T_pad,B,H), hfin (2,B,H) f32,
    cfin (2,B,H) f32)."""
    _, T_pad, B, G = gates.shape
    H = G // 4
    nc = T_pad // tc
    unroll = _pick_unroll(tc, B, H)

    kernel = functools.partial(_lstm_dir_chunk_kernel,
                               seq_len=seq_len, tc=tc, unroll=unroll)

    # fwd (d=0) walks time blocks c, rev (d=1) walks them in reverse.
    gate_idx = lambda d, c: (d, c + d * (nc - 1 - 2 * c), 0, 0)
    const_idx = lambda d, c: (d, 0, 0)

    grid_spec = pltpu.PrefetchScalarGridSpec(
        num_scalar_prefetch=0,
        grid=(2, nc),
        in_specs=[
            pl.BlockSpec((None, tc, B, 4 * H), gate_idx),       # gates
            _whh_block_spec(H, gates.dtype.itemsize),           # W_hh (resident)
        ],
        out_specs=[
            pl.BlockSpec((None, tc, B, H), gate_idx),            # hseq
            pl.BlockSpec((None, B, H), const_idx),               # final h (carry)
            pl.BlockSpec((None, B, H), const_idx),               # final c (carry)
        ],
    )

    out_shape = (
        jax.ShapeDtypeStruct((2, T_pad, B, H), hseq_dtype),
        jax.ShapeDtypeStruct((2, B, H), jnp.float32),
        jax.ShapeDtypeStruct((2, B, H), jnp.float32),
    )

    cost = pl.CostEstimate(
        flops=int(2 * 2 * T_pad * B * H * 4 * H),
        transcendentals=int(2 * T_pad * B * 5 * H),
        bytes_accessed=int(gates.size * gates.dtype.itemsize
                           + whh.size * whh.dtype.itemsize
                           + 2 * T_pad * B * H * jnp.dtype(hseq_dtype).itemsize
                           + 2 * 2 * B * H * 4),
    )

    return pl.pallas_call(
        kernel,
        out_shape=out_shape,
        grid_spec=grid_spec,
        compiler_params=pltpu.CompilerParams(
            dimension_semantics=("parallel", "arbitrary"),   # dirs || , time seq
            vmem_limit_bytes=_vmem_limit_bytes(tc, B, H, gates.dtype, hseq_dtype)),
        cost_estimate=cost,
    )(gates, whh)


# ----------------------------------------------------------------------------
# Parameter handling (PyTorch nn.LSTM-shaped params -> kernel-friendly layout)
# ----------------------------------------------------------------------------
def init_rnn_layer_params(key, input_dim, hid_dim, n_layers):
    """Deterministic init matching nn.LSTM param shapes (bidirectional)."""
    params = {}
    k = 1.0 / math.sqrt(hid_dim)
    for layer in range(n_layers):
        layer_in = input_dim if layer == 0 else 2 * hid_dim
        for direction in range(2):
            key, k1, k2, k3, k4 = jax.random.split(key, 5)
            params[(layer, direction)] = dict(
                w_ih=jax.random.uniform(k1, (4 * hid_dim, layer_in), jnp.float32, -k, k),
                w_hh=jax.random.uniform(k2, (4 * hid_dim, hid_dim), jnp.float32, -k, k),
                b_ih=jax.random.uniform(k3, (4 * hid_dim,), jnp.float32, -k, k),
                b_hh=jax.random.uniform(k4, (4 * hid_dim,), jnp.float32, -k, k),
            )
    return params


def _reorder_ifgo_to_ifog(w, axis=0):
    """Permute the 4H gate axis from PyTorch order (i,f,g,o) to (i,f,o,g)."""
    i, f, g, o = jnp.split(w, 4, axis=axis)
    return jnp.concatenate([i, f, o, g], axis=axis)


def prepare_rnn_params(params, hid_dim, n_layers, compute_dtype=jnp.float32):
    """Pre-transpose / pre-stack weights ONCE, outside the jit'd forward.
    compute_dtype=bf16 halves HBM traffic for gates/weights (carries stay f32)."""
    H = hid_dim
    prepared = []
    for layer in range(n_layers):
        pf = params[(layer, 0)]
        pr = params[(layer, 1)]
        wih_f = _reorder_ifgo_to_ifog(pf["w_ih"]).T            # (Din, 4H)
        wih_r = _reorder_ifgo_to_ifog(pr["w_ih"]).T
        b_f = _reorder_ifgo_to_ifog(pf["b_ih"] + pf["b_hh"])   # (4H,)
        b_r = _reorder_ifgo_to_ifog(pr["b_ih"] + pr["b_hh"])
        whh_f = _reorder_ifgo_to_ifog(pf["w_hh"]).T            # (H, 4H)
        whh_r = _reorder_ifgo_to_ifog(pr["w_hh"]).T
        if layer == 0:
            w_in = jnp.stack([wih_f, wih_r], axis=0)           # (2, D, 4H)
        else:
            # (2_out, 2_src, H, 4H): split the 2H input rows into fwd/rev source
            # halves so the next layer never needs a (T,B,2H) HBM concat.
            w_in = jnp.stack([jnp.stack([wih_f[:H], wih_f[H:]], axis=0),
                              jnp.stack([wih_r[:H], wih_r[H:]], axis=0)], axis=0)
        prepared.append(dict(
            w_in=w_in.astype(compute_dtype),
            b_in=jnp.stack([b_f, b_r], axis=0).astype(jnp.float32),   # (2, 4H)
            w_hh=jnp.stack([whh_f, whh_r], axis=0).astype(compute_dtype),  # (2, H, 4H)
        ))
    return prepared


# ----------------------------------------------------------------------------
# Forward pass (equivalent of RNN_layer.forward)
# ----------------------------------------------------------------------------
@functools.partial(jax.jit, static_argnames=("hid_dim", "n_layers", "max_chunk"))
def rnn_layer_forward(src, prepared_params, hid_dim, n_layers, max_chunk=None):
    """src: (B, T, input_dim), batch_first.
    returns:
      outputs: (B, T, 2*hid_dim)               f32
      hidden:  (2*n_layers, B, hid_dim)  f32   (index = layer*2 + direction)
      cell:    (2*n_layers, B, hid_dim)  f32
    """
    B, T, _ = src.shape
    cdt = prepared_params[0]["w_hh"].dtype                      # compute/streaming dtype
    x = jnp.transpose(src, (1, 0, 2)).astype(cdt)               # (T, B, D) time-major

    tc = _pick_chunk(T, B, hid_dim, cdt, max_chunk)
    nc = -(-T // tc)
    T_pad = nc * tc
    if T_pad != T:
        x = jnp.concatenate(
            [x, jnp.zeros((T_pad - T, B, x.shape[-1]), cdt)], axis=0)

    hiddens, cells = [], []
    hseq = None
    for layer in range(n_layers):
        p = prepared_params[layer]
        # Hoisted input projection for both directions over all timesteps at once.
        if layer == 0:
            g = jnp.einsum('tbd,edg->etbg', x, p["w_in"],
                           preferred_element_type=jnp.float32)          # (2,T_pad,B,4H)
        else:
            # hseq: (2_src, T_pad, B, H); contract source-dir axis -> no HBM concat.
            g = jnp.einsum('stbh,eshg->etbg', hseq, p["w_in"],
                           preferred_element_type=jnp.float32)
        g = (g + p["b_in"][:, None, None, :]).astype(cdt)

        out_dt = jnp.float32 if layer == n_layers - 1 else cdt
        hseq, hfin, cfin = _run_bidir_layer(g, p["w_hh"], seq_len=T, tc=tc,
                                            hseq_dtype=out_dt)
        hiddens.append(hfin)                                     # (2, B, H): [fwd, rev]
        cells.append(cfin)

    out = jnp.concatenate([hseq[0, :T], hseq[1, :T]], axis=-1)   # (T, B, 2H), final only
    outputs = jnp.transpose(out, (1, 0, 2)).astype(jnp.float32)  # (B, T, 2H)
    hidden = jnp.concatenate(hiddens, axis=0)                    # (2*n_layers, B, H)
    cell = jnp.concatenate(cells, axis=0)
    return outputs, hidden, cell


# ----------------------------------------------------------------------------
# Pure-JAX reference (for correctness checking only)
# ----------------------------------------------------------------------------
def _lstm_ref_single(x_tbd, w_ih, w_hh, b_ih, b_hh, reverse):
    T, B, _ = x_tbd.shape
    H = w_hh.shape[1]

    def step(carry, x_t):
        h, c = carry
        gates = x_t @ w_ih.T + h @ w_hh.T + b_ih + b_hh
        i = jax.nn.sigmoid(gates[:, 0 * H:1 * H])
        f = jax.nn.sigmoid(gates[:, 1 * H:2 * H])
        g = jnp.tanh(gates[:, 2 * H:3 * H])
        o = jax.nn.sigmoid(gates[:, 3 * H:4 * H])
        c = f * c + i * g
        h = o * jnp.tanh(c)
        return (h, c), h

    init = (jnp.zeros((B, H), jnp.float32), jnp.zeros((B, H), jnp.float32))
    (hT, cT), hs = jax.lax.scan(step, init, x_tbd, reverse=reverse)
    return hs, hT, cT


def rnn_layer_reference(src, params, hid_dim, n_layers):
    x = jnp.transpose(src, (1, 0, 2)).astype(jnp.float32)
    hiddens, cells = [], []
    layer_in = x
    for layer in range(n_layers):
        pf = params[(layer, 0)]
        pr = params[(layer, 1)]
        hf, hTf, cTf = _lstm_ref_single(layer_in, pf["w_ih"], pf["w_hh"],
                                        pf["b_ih"], pf["b_hh"], reverse=False)
        hr, hTr, cTr = _lstm_ref_single(layer_in, pr["w_ih"], pr["w_hh"],
                                        pr["b_ih"], pr["b_hh"], reverse=True)
        layer_in = jnp.concatenate([hf, hr], axis=-1)
        hiddens += [hTf, hTr]
        cells += [cTf, cTr]
    return (jnp.transpose(layer_in, (1, 0, 2)),
            jnp.stack(hiddens, axis=0),
            jnp.stack(cells, axis=0))


if __name__ == "__main__":
    # Small shapes consistent with the module: batch=2, seq=8, input_dim=16,
    # hid_dim=32, n_layers=2 (the dropout ctor arg is unused by the forward).
    B, T, D_IN, HID, NLAYERS = 2, 8, 16, 32, 2

    key = jax.random.PRNGKey(0)
    key, pkey, xkey = jax.random.split(key, 3)
    params = init_rnn_layer_params(pkey, D_IN, HID, NLAYERS)
    src = jax.random.normal(xkey, (B, T, D_IN), dtype=jnp.float32)

    # --- f32 path (matches PyTorch numerics) ---------------------------------
    prep32 = prepare_rnn_params(params, HID, NLAYERS, compute_dtype=jnp.float32)
    outputs, hidden, cell = rnn_layer_forward(src, prep32, hid_dim=HID, n_layers=NLAYERS)
    jax.block_until_ready((outputs, hidden, cell))

    assert outputs.shape == (B, T, 2 * HID)
    assert hidden.shape == (2 * NLAYERS, B, HID)
    assert cell.shape == (2 * NLAYERS, B, HID)

    out_ref, hid_ref, cell_ref = rnn_layer_reference(src, params, HID, NLAYERS)
    assert jnp.allclose(outputs, out_ref, atol=1e-4, rtol=1e-4)
    assert jnp.allclose(hidden, hid_ref, atol=1e-4, rtol=1e-4)
    assert jnp.allclose(cell, cell_ref, atol=1e-4, rtol=1e-4)

    # --- tail-masking path: T not a multiple of the time chunk ---------------
    T2 = 7
    src2 = src[:, :T2]
    o2, h2, c2 = rnn_layer_forward(src2, prep32, hid_dim=HID, n_layers=NLAYERS,
                                   max_chunk=4)                  # nc=2, 1 padded step
    jax.block_until_ready((o2, h2, c2))
    o2r, h2r, c2r = rnn_layer_reference(src2, params, HID, NLAYERS)
    assert jnp.allclose(o2, o2r, atol=1e-4, rtol=1e-4)
    assert jnp.allclose(h2, h2r, atol=1e-4, rtol=1e-4)
    assert jnp.allclose(c2, c2r, atol=1e-4, rtol=1e-4)

    # --- bf16 streaming path (performance configuration) ---------------------
    prep16 = prepare_rnn_params(params, HID, NLAYERS, compute_dtype=jnp.bfloat16)
    ob, hb, cb = rnn_layer_forward(src, prep16, hid_dim=HID, n_layers=NLAYERS)
    jax.block_until_ready((ob, hb, cb))
    assert ob.shape == (B, T, 2 * HID)
    assert jnp.allclose(ob, out_ref, atol=5e-2, rtol=5e-2)
    assert jnp.allclose(hb, hid_ref, atol=5e-2, rtol=5e-2)
    assert jnp.allclose(cb, cell_ref, atol=5e-2, rtol=5e-2)

    print("KERNEL_OK")
</pallas_src>

<mosaic_0001>
module attributes {stable_mosaic.version = 11 : i64} {
  func.func @_lstm_dir_chunk_kernel(%arg0: i32, %arg1: i32, %arg2: memref<1x8x2x128xf32, #tpu.memory_space<vmem>>, %arg3: memref<1x32x128xf32, #tpu.memory_space<vmem>>, %arg4: memref<1x8x2x32xf32, #tpu.memory_space<vmem>>, %arg5: memref<1x2x32xf32, #tpu.memory_space<vmem>>, %arg6: memref<1x2x32xf32, #tpu.memory_space<vmem>>) attributes {dimension_semantics = [#tpu.dimension_semantics<parallel>, #tpu.dimension_semantics<arbitrary>], iteration_bounds = array<i64: 2, 1>, scalar_prefetch = 0 : i64, scratch_operands = 0 : i64, tpu.core_type = #tpu.core_type<tc>, window_params = [{transform_indices = @transform_0, window_bounds = array<i64: 1, 8, 2, 128>}, {transform_indices = @transform_1, window_bounds = array<i64: 1, 32, 128>}, {transform_indices = @transform_2, window_bounds = array<i64: 1, 8, 2, 32>}, {transform_indices = @transform_3, window_bounds = array<i64: 1, 2, 32>}, {transform_indices = @transform_4, window_bounds = array<i64: 1, 2, 32>}]} {
    %c0_i32 = arith.constant 0 : i32
    %0 = arith.cmpi eq, %arg1, %c0_i32 : i32
    %1 = arith.extui %0 : i1 to i32
    %c0_i32_0 = arith.constant 0 : i32
    %2 = arith.cmpi ne, %1, %c0_i32_0 : i32
    scf.if %2 {
      %cst_106 = arith.constant 0.000000e+00 : f32
      %284 = vector.broadcast %cst_106 : f32 to vector<2x32xf32>
      %c0_107 = arith.constant 0 : index
      %c0_108 = arith.constant 0 : index
      %c0_109 = arith.constant 0 : index
      %285 = vector.load %arg5[%c0_107, %c0_108, %c0_109] : memref<1x2x32xf32, #tpu.memory_space<vmem>>, vector<1x2x32xf32>
      %286 = vector.shape_cast %285 : vector<1x2x32xf32> to vector<2x32xf32>
      %287 = vector.shape_cast %284 : vector<2x32xf32> to vector<1x2x32xf32>
      tpu.vector_store %arg5[%c0_107, %c0_108, %c0_109], %287 {strides = array<i32>} : memref<1x2x32xf32, #tpu.memory_space<vmem>>, vector<1x2x32xf32>,
      %cst_110 = arith.constant 0.000000e+00 : f32
      %288 = vector.broadcast %cst_110 : f32 to vector<2x32xf32>
      %c0_111 = arith.constant 0 : index
      %c0_112 = arith.constant 0 : index
      %c0_113 = arith.constant 0 : index
      %289 = vector.load %arg6[%c0_111, %c0_112, %c0_113] : memref<1x2x32xf32, #tpu.memory_space<vmem>>, vector<1x2x32xf32>
      %290 = vector.shape_cast %289 : vector<1x2x32xf32> to vector<2x32xf32>
      %291 = vector.shape_cast %288 : vector<2x32xf32> to vector<1x2x32xf32>
      tpu.vector_store %arg6[%c0_111, %c0_112, %c0_113], %291 {strides = array<i32>} : memref<1x2x32xf32, #tpu.memory_space<vmem>>, vector<1x2x32xf32>,
    } else {
    }
    %c0 = arith.constant 0 : index
    %c0_1 = arith.constant 0 : index
    %c0_2 = arith.constant 0 : index
    %3 = vector.load %arg3[%c0, %c0_1, %c0_2] : memref<1x32x128xf32, #tpu.memory_space<vmem>>, vector<1x32x128xf32>
    %4 = vector.shape_cast %3 : vector<1x32x128xf32> to vector<32x128xf32>
    %c2_i32 = arith.constant 2 : i32
    %5 = arith.muli %c2_i32, %arg1 : i32
    %c0_i32_3 = arith.constant 0 : i32
    %6 = arith.subi %c0_i32_3, %5 : i32
    %7 = arith.muli %arg0, %6 : i32
    %8 = arith.addi %arg1, %7 : i32
    %c8_i32 = arith.constant 8 : i32
    %9 = arith.muli %8, %c8_i32 : i32
    %c0_4 = arith.constant 0 : index
    %c0_5 = arith.constant 0 : index
    %c0_6 = arith.constant 0 : index
    %10 = vector.load %arg5[%c0_4, %c0_5, %c0_6] : memref<1x2x32xf32, #tpu.memory_space<vmem>>, vector<1x2x32xf32>
    %11 = vector.shape_cast %10 : vector<1x2x32xf32> to vector<2x32xf32>
    %c0_7 = arith.constant 0 : index
    %c0_8 = arith.constant 0 : index
    %c0_9 = arith.constant 0 : index
    %12 = vector.load %arg6[%c0_7, %c0_8, %c0_9] : memref<1x2x32xf32, #tpu.memory_space<vmem>>, vector<1x2x32xf32>
    %13 = vector.shape_cast %12 : vector<1x2x32xf32> to vector<2x32xf32>
    %c0_i32_10 = arith.constant 0 : i32
    %c2_i32_11 = arith.constant 2 : i32
    %14 = arith.muli %c2_i32_11, %c0_i32_10 : i32
    %c7_i32 = arith.constant 7 : i32
    %15 = arith.subi %c7_i32, %14 : i32
    %16 = arith.muli %arg0, %15 : i32
    %17 = arith.addi %c0_i32_10, %16 : i32
    %18 = arith.addi %9, %17 : i32
    %c8_i32_12 = arith.constant 8 : i32
    %19 = arith.cmpi slt, %18, %c8_i32_12 : i32
    %cst = arith.constant dense<0.000000e+00> : vector<2x128xf32>
    %20 = tpu.matmul %11, %4, %cst {dimension_numbers = #tpu.dot_dimension_numbers<[1], [0], [0], [1], [0, 0, 1, 1], [], []>} : vector<2x32xf32>, vector<32x128xf32>, vector<2x128xf32> -> vector<2x128xf32>
    %c0_13 = arith.constant 0 : index
    %21 = arith.index_cast %17 : i32 to index
    %c0_14 = arith.constant 0 : index
    %c0_15 = arith.constant 0 : index
    %22 = vector.load %arg2[%c0_13, %21, %c0_14, %c0_15] : memref<1x8x2x128xf32, #tpu.memory_space<vmem>>, vector<1x1x2x128xf32>
    %23 = vector.shape_cast %22 : vector<1x1x2x128xf32> to vector<2x128xf32>
    %24 = arith.addf %20, %23 : vector<2x128xf32>
    %25 = vector.extract_strided_slice %24 {offsets = [0, 0], sizes = [2, 96], strides = [1, 1]} : vector<2x128xf32> to vector<2x96xf32>
    %26 = arith.negf %25 : vector<2x96xf32>
    %27 = math.exp %26 : vector<2x96xf32>
    %cst_16 = arith.constant 1.000000e+00 : f32
    %28 = vector.broadcast %cst_16 : f32 to vector<2x96xf32>
    %29 = arith.addf %28, %27 : vector<2x96xf32>
    %30 = arith.divf %28, %29 : vector<2x96xf32>
    %31 = vector.extract_strided_slice %24 {offsets = [0, 96], sizes = [2, 32], strides = [1, 1]} : vector<2x128xf32> to vector<2x32xf32>
    %32 = math.tanh %31 : vector<2x32xf32>
    %33 = vector.extract_strided_slice %30 {offsets = [0, 0], sizes = [2, 32], strides = [1, 1]} : vector<2x96xf32> to vector<2x32xf32>
    %34 = vector.extract_strided_slice %30 {offsets = [0, 32], sizes = [2, 32], strides = [1, 1]} : vector<2x96xf32> to vector<2x32xf32>
    %35 = vector.extract_strided_slice %30 {offsets = [0, 64], sizes = [2, 32], strides = [1, 1]} : vector<2x96xf32> to vector<2x32xf32>
    %36 = arith.mulf %34, %13 : vector<2x32xf32>
    %37 = arith.mulf %33, %32 : vector<2x32xf32>
    %38 = arith.addf %36, %37 : vector<2x32xf32>
    %39 = math.tanh %38 : vector<2x32xf32>
    %40 = arith.mulf %35, %39 : vector<2x32xf32>
    %41 = arith.select %19, %38, %13 : vector<2x32xf32>
    %42 = arith.select %19, %40, %11 : vector<2x32xf32>
    %c0_17 = arith.constant 0 : index
    %43 = arith.index_cast %17 : i32 to index
    %c0_18 = arith.constant 0 : index
    %c0_19 = arith.constant 0 : index
    %44 = vector.load %arg4[%c0_17, %43, %c0_18, %c0_19] : memref<1x8x2x32xf32, #tpu.memory_space<vmem>>, vector<1x1x2x32xf32>
    %45 = vector.shape_cast %44 : vector<1x1x2x32xf32> to vector<2x32xf32>
    %46 = vector.shape_cast %42 : vector<2x32xf32> to vector<1x1x2x32xf32>
    tpu.vector_store %arg4[%c0_17, %43, %c0_18, %c0_19], %46 {strides = array<i32>} : memref<1x8x2x32xf32, #tpu.memory_space<vmem>>, vector<1x1x2x32xf32>,
    %c1_i32 = arith.constant 1 : i32
    %c2_i32_20 = arith.constant 2 : i32
    %47 = arith.muli %c2_i32_20, %c1_i32 : i32
    %c7_i32_21 = arith.constant 7 : i32
    %48 = arith.subi %c7_i32_21, %47 : i32
    %49 = arith.muli %arg0, %48 : i32
    %50 = arith.addi %c1_i32, %49 : i32
    %51 = arith.addi %9, %50 : i32
    %c8_i32_22 = arith.constant 8 : i32
    %52 = arith.cmpi slt, %51, %c8_i32_22 : i32
    %cst_23 = arith.constant dense<0.000000e+00> : vector<2x128xf32>
    %53 = tpu.matmul %42, %4, %cst_23 {dimension_numbers = #tpu.dot_dimension_numbers<[1], [0], [0], [1], [0, 0, 1, 1], [], []>} : vector<2x32xf32>, vector<32x128xf32>, vector<2x128xf32> -> vector<2x128xf32>
    %c0_24 = arith.constant 0 : index
    %54 = arith.index_cast %50 : i32 to index
    %c0_25 = arith.constant 0 : index
    %c0_26 = arith.constant 0 : index
    %55 = vector.load %arg2[%c0_24, %54, %c0_25, %c0_26] : memref<1x8x2x128xf32, #tpu.memory_space<vmem>>, vector<1x1x2x128xf32>
    %56 = vector.shape_cast %55 : vector<1x1x2x128xf32> to vector<2x128xf32>
    %57 = arith.addf %53, %56 : vector<2x128xf32>
    %58 = vector.extract_strided_slice %57 {offsets = [0, 0], sizes = [2, 96], strides = [1, 1]} : vector<2x128xf32> to vector<2x96xf32>
    %59 = arith.negf %58 : vector<2x96xf32>
    %60 = math.exp %59 : vector<2x96xf32>
    %cst_27 = arith.constant 1.000000e+00 : f32
    %61 = vector.broadcast %cst_27 : f32 to vector<2x96xf32>
    %62 = arith.addf %61, %60 : vector<2x96xf32>
    %63 = arith.divf %61, %62 : vector<2x96xf32>
    %64 = vector.extract_strided_slice %57 {offsets = [0, 96], sizes = [2, 32], strides = [1, 1]} : vector<2x128xf32> to vector<2x32xf32>
    %65 = math.tanh %64 : vector<2x32xf32>
    %66 = vector.extract_strided_slice %63 {offsets = [0, 0], sizes = [2, 32], strides = [1, 1]} : vector<2x96xf32> to vector<2x32xf32>
    %67 = vector.extract_strided_slice %63 {offsets = [0, 32], sizes = [2, 32], strides = [1, 1]} : vector<2x96xf32> to vector<2x32xf32>
    %68 = vector.extract_strided_slice %63 {offsets = [0, 64], sizes = [2, 32], strides = [1, 1]} : vector<2x96xf32> to vector<2x32xf32>
    %69 = arith.mulf %67, %41 : vector<2x32xf32>
    %70 = arith.mulf %66, %65 : vector<2x32xf32>
    %71 = arith.addf %69, %70 : vector<2x32xf32>
    %72 = math.tanh %71 : vector<2x32xf32>
    %73 = arith.mulf %68, %72 : vector<2x32xf32>
    %74 = arith.select %52, %71, %41 : vector<2x32xf32>
    %75 = arith.select %52, %73, %42 : vector<2x32xf32>
    %c0_28 = arith.constant 0 : index
    %76 = arith.index_cast %50 : i32 to index
    %c0_29 = arith.constant 0 : index
    %c0_30 = arith.constant 0 : index
    %77 = vector.load %arg4[%c0_28, %76, %c0_29, %c0_30] : memref<1x8x2x32xf32, #tpu.memory_space<vmem>>, vector<1x1x2x32xf32>
    %78 = vector.shape_cast %77 : vector<1x1x2x32xf32> to vector<2x32xf32>
    %79 = vector.shape_cast %75 : vector<2x32xf32> to vector<1x1x2x32xf32>
    tpu.vector_store %arg4[%c0_28, %76, %c0_29, %c0_30], %79 {strides = array<i32>} : memref<1x8x2x32xf32, #tpu.memory_space<vmem>>, vector<1x1x2x32xf32>,
    %c2_i32_31 = arith.constant 2 : i32
    %c2_i32_32 = arith.constant 2 : i32
    %80 = arith.muli %c2_i32_32, %c2_i32_31 : i32
    %c7_i32_33 = arith.constant 7 : i32
    %81 = arith.subi %c7_i32_33, %80 : i32
    %82 = arith.muli %arg0, %81 : i32
    %83 = arith.addi %c2_i32_31, %82 : i32
    %84 = arith.addi %9, %83 : i32
    %c8_i32_34 = arith.constant 8 : i32
    %85 = arith.cmpi slt, %84, %c8_i32_34 : i32
    %cst_35 = arith.constant dense<0.000000e+00> : vector<2x128xf32>
    %86 = tpu.matmul %75, %4, %cst_35 {dimension_numbers = #tpu.dot_dimension_numbers<[1], [0], [0], [1], [0, 0, 1, 1], [], []>} : vector<2x32xf32>, vector<32x128xf32>, vector<2x128xf32> -> vector<2x128xf32>
    %c0_36 = arith.constant 0 : index
    %87 = arith.index_cast %83 : i32 to index
    %c0_37 = arith.constant 0 : index
    %c0_38 = arith.constant 0 : index
    %88 = vector.load %arg2[%c0_36, %87, %c0_37, %c0_38] : memref<1x8x2x128xf32, #tpu.memory_space<vmem>>, vector<1x1x2x128xf32>
    %89 = vector.shape_cast %88 : vector<1x1x2x128xf32> to vector<2x128xf32>
    %90 = arith.addf %86, %89 : vector<2x128xf32>
    %91 = vector.extract_strided_slice %90 {offsets = [0, 0], sizes = [2, 96], strides = [1, 1]} : vector<2x128xf32> to vector<2x96xf32>
    %92 = arith.negf %91 : vector<2x96xf32>
    %93 = math.exp %92 : vector<2x96xf32>
    %cst_39 = arith.constant 1.000000e+00 : f32
    %94 = vector.broadcast %cst_39 : f32 to vector<2x96xf32>
    %95 = arith.addf %94, %93 : vector<2x96xf32>
    %96 = arith.divf %94, %95 : vector<2x96xf32>
    %97 = vector.extract_strided_slice %90 {offsets = [0, 96], sizes = [2, 32], strides = [1, 1]} : vector<2x128xf32> to vector<2x32xf32>
    %98 = math.tanh %97 : vector<2x32xf32>
    %99 = vector.extract_strided_slice %96 {offsets = [0, 0], sizes = [2, 32], strides = [1, 1]} : vector<2x96xf32> to vector<2x32xf32>
    %100 = vector.extract_strided_slice %96 {offsets = [0, 32], sizes = [2, 32], strides = [1, 1]} : vector<2x96xf32> to vector<2x32xf32>
    %101 = vector.extract_strided_slice %96 {offsets = [0, 64], sizes = [2, 32], strides = [1, 1]} : vector<2x96xf32> to vector<2x32xf32>
    %102 = arith.mulf %100, %74 : vector<2x32xf32>
    %103 = arith.mulf %99, %98 : vector<2x32xf32>
    %104 = arith.addf %102, %103 : vector<2x32xf32>
    %105 = math.tanh %104 : vector<2x32xf32>
    %106 = arith.mulf %101, %105 : vector<2x32xf32>
    %107 = arith.select %85, %104, %74 : vector<2x32xf32>
    %108 = arith.select %85, %106, %75 : vector<2x32xf32>
    %c0_40 = arith.constant 0 : index
    %109 = arith.index_cast %83 : i32 to index
    %c0_41 = arith.constant 0 : index
    %c0_42 = arith.constant 0 : index
    %110 = vector.load %arg4[%c0_40, %109, %c0_41, %c0_42] : memref<1x8x2x32xf32, #tpu.memory_space<vmem>>, vector<1x1x2x32xf32>
    %111 = vector.shape_cast %110 : vector<1x1x2x32xf32> to vector<2x32xf32>
    %112 = vector.shape_cast %108 : vector<2x32xf32> to vector<1x1x2x32xf32>
    tpu.vector_store %arg4[%c0_40, %109, %c0_41, %c0_42], %112 {strides = array<i32>} : memref<1x8x2x32xf32, #tpu.memory_space<vmem>>, vector<1x1x2x32xf32>,
    %c3_i32 = arith.constant 3 : i32
    %c2_i32_43 = arith.constant 2 : i32
    %113 = arith.muli %c2_i32_43, %c3_i32 : i32
    %c7_i32_44 = arith.constant 7 : i32
    %114 = arith.subi %c7_i32_44, %113 : i32
    %115 = arith.muli %arg0, %114 : i32
    %116 = arith.addi %c3_i32, %115 : i32
    %117 = arith.addi %9, %116 : i32
    %c8_i32_45 = arith.constant 8 : i32
    %118 = arith.cmpi slt, %117, %c8_i32_45 : i32
    %cst_46 = arith.constant dense<0.000000e+00> : vector<2x128xf32>
    %119 = tpu.matmul %108, %4, %cst_46 {dimension_numbers = #tpu.dot_dimension_numbers<[1], [0], [0], [1], [0, 0, 1, 1], [], []>} : vector<2x32xf32>, vector<32x128xf32>, vector<2x128xf32> -> vector<2x128xf32>
    %c0_47 = arith.constant 0 : index
    %120 = arith.index_cast %116 : i32 to index
    %c0_48 = arith.constant 0 : index
    %c0_49 = arith.constant 0 : index
    %121 = vector.load %arg2[%c0_47, %120, %c0_48, %c0_49] : memref<1x8x2x128xf32, #tpu.memory_space<vmem>>, vector<1x1x2x128xf32>
    %122 = vector.shape_cast %121 : vector<1x1x2x128xf32> to vector<2x128xf32>
    %123 = arith.addf %119, %122 : vector<2x128xf32>
    %124 = vector.extract_strided_slice %123 {offsets = [0, 0], sizes = [2, 96], strides = [1, 1]} : vector<2x128xf32> to vector<2x96xf32>
    %125 = arith.negf %124 : vector<2x96xf32>
    %126 = math.exp %125 : vector<2x96xf32>
    %cst_50 = arith.constant 1.000000e+00 : f32
    %127 = vector.broadcast %cst_50 : f32 to vector<2x96xf32>
    %128 = arith.addf %127, %126 : vector<2x96xf32>
    %129 = arith.divf %127, %128 : vector<2x96xf32>
    %130 = vector.extract_strided_slice %123 {offsets = [0, 96], sizes = [2, 32], strides = [1, 1]} : vector<2x128xf32> to vector<2x32xf32>
    %131 = math.tanh %130 : vector<2x32xf32>
    %132 = vector.extract_strided_slice %129 {offsets = [0, 0], sizes = [2, 32], strides = [1, 1]} : vector<2x96xf32> to vector<2x32xf32>
    %133 = vector.extract_strided_slice %129 {offsets = [0, 32], sizes = [2, 32], strides = [1, 1]} : vector<2x96xf32> to vector<2x32xf32>
    %134 = vector.extract_strided_slice %129 {offsets = [0, 64], sizes = [2, 32], strides = [1, 1]} : vector<2x96xf32> to vector<2x32xf32>
    %135 = arith.mulf %133, %107 : vector<2x32xf32>
    %136 = arith.mulf %132, %131 : vector<2x32xf32>
    %137 = arith.addf %135, %136 : vector<2x32xf32>
    %138 = math.tanh %137 : vector<2x32xf32>
    %139 = arith.mulf %134, %138 : vector<2x32xf32>
    %140 = arith.select %118, %137, %107 : vector<2x32xf32>
    %141 = arith.select %118, %139, %108 : vector<2x32xf32>
    %c0_51 = arith.constant 0 : index
    %142 = arith.index_cast %116 : i32 to index
    %c0_52 = arith.constant 0 : index
    %c0_53 = arith.constant 0 : index
    %143 = vector.load %arg4[%c0_51, %142, %c0_52, %c0_53] : memref<1x8x2x32xf32, #tpu.memory_space<vmem>>, vector<1x1x2x32xf32>
    %144 = vector.shape_cast %143 : vector<1x1x2x32xf32> to vector<2x32xf32>
    %145 = vector.shape_cast %141 : vector<2x32xf32> to vector<1x1x2x32xf32>
    tpu.vector_store %arg4[%c0_51, %142, %c0_52, %c0_53], %145 {strides = array<i32>} : memref<1x8x2x32xf32, #tpu.memory_space<vmem>>, vector<1x1x2x32xf32>,
    %c4_i32 = arith.constant 4 : i32
    %c2_i32_54 = arith.constant 2 : i32
    %146 = arith.muli %c2_i32_54, %c4_i32 : i32
    %c7_i32_55 = arith.constant 7 : i32
    %147 = arith.subi %c7_i32_55, %146 : i32
    %148 = arith.muli %arg0, %147 : i32
    %149 = arith.addi %c4_i32, %148 : i32
    %150 = arith.addi %9, %149 : i32
    %c8_i32_56 = arith.constant 8 : i32
    %151 = arith.cmpi slt, %150, %c8_i32_56 : i32
    %cst_57 = arith.constant dense<0.000000e+00> : vector<2x128xf32>
    %152 = tpu.matmul %141, %4, %cst_57 {dimension_numbers = #tpu.dot_dimension_numbers<[1], [0], [0], [1], [0, 0, 1, 1], [], []>} : vector<2x32xf32>, vector<32x128xf32>, vector<2x128xf32> -> vector<2x128xf32>
    %c0_58 = arith.constant 0 : index
    %153 = arith.index_cast %149 : i32 to index
    %c0_59 = arith.constant 0 : index
    %c0_60 = arith.constant 0 : index
    %154 = vector.load %arg2[%c0_58, %153, %c0_59, %c0_60] : memref<1x8x2x128xf32, #tpu.memory_space<vmem>>, vector<1x1x2x128xf32>
    %155 = vector.shape_cast %154 : vector<1x1x2x128xf32> to vector<2x128xf32>
    %156 = arith.addf %152, %155 : vector<2x128xf32>
    %157 = vector.extract_strided_slice %156 {offsets = [0, 0], sizes = [2, 96], strides = [1, 1]} : vector<2x128xf32> to vector<2x96xf32>
    %158 = arith.negf %157 : vector<2x96xf32>
    %159 = math.exp %158 : vector<2x96xf32>
    %cst_61 = arith.constant 1.000000e+00 : f32
    %160 = vector.broadcast %cst_61 : f32 to vector<2x96xf32>
    %161 = arith.addf %160, %159 : vector<2x96xf32>
    %162 = arith.divf %160, %161 : vector<2x96xf32>
    %163 = vector.extract_strided_slice %156 {offsets = [0, 96], sizes = [2, 32], strides = [1, 1]} : vector<2x128xf32> to vector<2x32xf32>
    %164 = math.tanh %163 : vector<2x32xf32>
    %165 = vector.extract_strided_slice %162 {offsets = [0, 0], sizes = [2, 32], strides = [1, 1]} : vector<2x96xf32> to vector<2x32xf32>
    %166 = vector.extract_strided_slice %162 {offsets = [0, 32], sizes = [2, 32], strides = [1, 1]} : vector<2x96xf32> to vector<2x32xf32>
    %167 = vector.extract_strided_slice %162 {offsets = [0, 64], sizes = [2, 32], strides = [1, 1]} : vector<2x96xf32> to vector<2x32xf32>
    %168 = arith.mulf %166, %140 : vector<2x32xf32>
    %169 = arith.mulf %165, %164 : vector<2x32xf32>
    %170 = arith.addf %168, %169 : vector<2x32xf32>
    %171 = math.tanh %170 : vector<2x32xf32>
    %172 = arith.mulf %167, %171 : vector<2x32xf32>
    %173 = arith.select %151, %170, %140 : vector<2x32xf32>
    %174 = arith.select %151, %172, %141 : vector<2x32xf32>
    %c0_62 = arith.constant 0 : index
    %175 = arith.index_cast %149 : i32 to index
    %c0_63 = arith.constant 0 : index
    %c0_64 = arith.constant 0 : index
    %176 = vector.load %arg4[%c0_62, %175, %c0_63, %c0_64] : memref<1x8x2x32xf32, #tpu.memory_space<vmem>>, vector<1x1x2x32xf32>
    %177 = vector.shape_cast %176 : vector<1x1x2x32xf32> to vector<2x32xf32>
    %178 = vector.shape_cast %174 : vector<2x32xf32> to vector<1x1x2x32xf32>
    tpu.vector_store %arg4[%c0_62, %175, %c0_63, %c0_64], %178 {strides = array<i32>} : memref<1x8x2x32xf32, #tpu.memory_space<vmem>>, vector<1x1x2x32xf32>,
    %c5_i32 = arith.constant 5 : i32
    %c2_i32_65 = arith.constant 2 : i32
    %179 = arith.muli %c2_i32_65, %c5_i32 : i32
    %c7_i32_66 = arith.constant 7 : i32
    %180 = arith.subi %c7_i32_66, %179 : i32
    %181 = arith.muli %arg0, %180 : i32
    %182 = arith.addi %c5_i32, %181 : i32
    %183 = arith.addi %9, %182 : i32
    %c8_i32_67 = arith.constant 8 : i32
    %184 = arith.cmpi slt, %183, %c8_i32_67 : i32
    %cst_68 = arith.constant dense<0.000000e+00> : vector<2x128xf32>
    %185 = tpu.matmul %174, %4, %cst_68 {dimension_numbers = #tpu.dot_dimension_numbers<[1], [0], [0], [1], [0, 0, 1, 1], [], []>} : vector<2x32xf32>, vector<32x128xf32>, vector<2x128xf32> -> vector<2x128xf32>
    %c0_69 = arith.constant 0 : index
    %186 = arith.index_cast %182 : i32 to index
    %c0_70 = arith.constant 0 : index
    %c0_71 = arith.constant 0 : index
    %187 = vector.load %arg2[%c0_69, %186, %c0_70, %c0_71] : memref<1x8x2x128xf32, #tpu.memory_space<vmem>>, vector<1x1x2x128xf32>
    %188 = vector.shape_cast %187 : vector<1x1x2x128xf32> to vector<2x128xf32>
    %189 = arith.addf %185, %188 : vector<2x128xf32>
    %190 = vector.extract_strided_slice %189 {offsets = [0, 0], sizes = [2, 96], strides = [1, 1]} : vector<2x128xf32> to vector<2x96xf32>
    %191 = arith.negf %190 : vector<2x96xf32>
    %192 = math.exp %191 : vector<2x96xf32>
    %cst_72 = arith.constant 1.000000e+00 : f32
    %193 = vector.broadcast %cst_72 : f32 to vector<2x96xf32>
    %194 = arith.addf %193, %192 : vector<2x96xf32>
    %195 = arith.divf %193, %194 : vector<2x96xf32>
    %196 = vector.extract_strided_slice %189 {offsets = [0, 96], sizes = [2, 32], strides = [1, 1]} : vector<2x128xf32> to vector<2x32xf32>
    %197 = math.tanh %196 : vector<2x32xf32>
    %198 = vector.extract_strided_slice %195 {offsets = [0, 0], sizes = [2, 32], strides = [1, 1]} : vector<2x96xf32> to vector<2x32xf32>
    %199 = vector.extract_strided_slice %195 {offsets = [0, 32], sizes = [2, 32], strides = [1, 1]} : vector<2x96xf32> to vector<2x32xf32>
    %200 = vector.extract_strided_slice %195 {offsets = [0, 64], sizes = [2, 32], strides = [1, 1]} : vector<2x96xf32> to vector<2x32xf32>
    %201 = arith.mulf %199, %173 : vector<2x32xf32>
    %202 = arith.mulf %198, %197 : vector<2x32xf32>
    %203 = arith.addf %201, %202 : vector<2x32xf32>
    %204 = math.tanh %203 : vector<2x32xf32>
    %205 = arith.mulf %200, %204 : vector<2x32xf32>
    %206 = arith.select %184, %203, %173 : vector<2x32xf32>
    %207 = arith.select %184, %205, %174 : vector<2x32xf32>
    %c0_73 = arith.constant 0 : index
    %208 = arith.index_cast %182 : i32 to index
    %c0_74 = arith.constant 0 : index
    %c0_75 = arith.constant 0 : index
    %209 = vector.load %arg4[%c0_73, %208, %c0_74, %c0_75] : memref<1x8x2x32xf32, #tpu.memory_space<vmem>>, vector<1x1x2x32xf32>
    %210 = vector.shape_cast %209 : vector<1x1x2x32xf32> to vector<2x32xf32>
    %211 = vector.shape_cast %207 : vector<2x32xf32> to vector<1x1x2x32xf32>
    tpu.vector_store %arg4[%c0_73, %208, %c0_74, %c0_75], %211 {strides = array<i32>} : memref<1x8x2x32xf32, #tpu.memory_space<vmem>>, vector<1x1x2x32xf32>,
    %c6_i32 = arith.constant 6 : i32
    %c2_i32_76 = arith.constant 2 : i32
    %212 = arith.muli %c2_i32_76, %c6_i32 : i32
    %c7_i32_77 = arith.constant 7 : i32
    %213 = arith.subi %c7_i32_77, %212 : i32
    %214 = arith.muli %arg0, %213 : i32
    %215 = arith.addi %c6_i32, %214 : i32
    %216 = arith.addi %9, %215 : i32
    %c8_i32_78 = arith.constant 8 : i32
    %217 = arith.cmpi slt, %216, %c8_i32_78 : i32
    %cst_79 = arith.constant dense<0.000000e+00> : vector<2x128xf32>
    %218 = tpu.matmul %207, %4, %cst_79 {dimension_numbers = #tpu.dot_dimension_numbers<[1], [0], [0], [1], [0, 0, 1, 1], [], []>} : vector<2x32xf32>, vector<32x128xf32>, vector<2x128xf32> -> vector<2x128xf32>
    %c0_80 = arith.constant 0 : index
    %219 = arith.index_cast %215 : i32 to index
    %c0_81 = arith.constant 0 : index
    %c0_82 = arith.constant 0 : index
    %220 = vector.load %arg2[%c0_80, %219, %c0_81, %c0_82] : memref<1x8x2x128xf32, #tpu.memory_space<vmem>>, vector<1x1x2x128xf32>
    %221 = vector.shape_cast %220 : vector<1x1x2x128xf32> to vector<2x128xf32>
    %222 = arith.addf %218, %221 : vector<2x128xf32>
    %223 = vector.extract_strided_slice %222 {offsets = [0, 0], sizes = [2, 96], strides = [1, 1]} : vector<2x128xf32> to vector<2x96xf32>
    %224 = arith.negf %223 : vector<2x96xf32>
    %225 = math.exp %224 : vector<2x96xf32>
    %cst_83 = arith.constant 1.000000e+00 : f32
    %226 = vector.broadcast %cst_83 : f32 to vector<2x96xf32>
    %227 = arith.addf %226, %225 : vector<2x96xf32>
    %228 = arith.divf %226, %227 : vector<2x96xf32>
    %229 = vector.extract_strided_slice %222 {offsets = [0, 96], sizes = [2, 32], strides = [1, 1]} : vector<2x128xf32> to vector<2x32xf32>
    %230 = math.tanh %229 : vector<2x32xf32>
    %231 = vector.extract_strided_slice %228 {offsets = [0, 0], sizes = [2, 32], strides = [1, 1]} : vector<2x96xf32> to vector<2x32xf32>
    %232 = vector.extract_strided_slice %228 {offsets = [0, 32], sizes = [2, 32], strides = [1, 1]} : vector<2x96xf32> to vector<2x32xf32>
    %233 = vector.extract_strided_slice %228 {offsets = [0, 64], sizes = [2, 32], strides = [1, 1]} : vector<2x96xf32> to vector<2x32xf32>
    %234 = arith.mulf %232, %206 : vector<2x32xf32>
    %235 = arith.mulf %231, %230 : vector<2x32xf32>
    %236 = arith.addf %234, %235 : vector<2x32xf32>
    %237 = math.tanh %236 : vector<2x32xf32>
    %238 = arith.mulf %233, %237 : vector<2x32xf32>
    %239 = arith.select %217, %236, %206 : vector<2x32xf32>
    %240 = arith.select %217, %238, %207 : vector<2x32xf32>
    %c0_84 = arith.constant 0 : index
    %241 = arith.index_cast %215 : i32 to index
    %c0_85 = arith.constant 0 : index
    %c0_86 = arith.constant 0 : index
    %242 = vector.load %arg4[%c0_84, %241, %c0_85, %c0_86] : memref<1x8x2x32xf32, #tpu.memory_space<vmem>>, vector<1x1x2x32xf32>
    %243 = vector.shape_cast %242 : vector<1x1x2x32xf32> to vector<2x32xf32>
    %244 = vector.shape_cast %240 : vector<2x32xf32> to vector<1x1x2x32xf32>
    tpu.vector_store %arg4[%c0_84, %241, %c0_85, %c0_86], %244 {strides = array<i32>} : memref<1x8x2x32xf32, #tpu.memory_space<vmem>>, vector<1x1x2x32xf32>,
    %c7_i32_87 = arith.constant 7 : i32
    %c2_i32_88 = arith.constant 2 : i32
    %245 = arith.muli %c2_i32_88, %c7_i32_87 : i32
    %c7_i32_89 = arith.constant 7 : i32
    %246 = arith.subi %c7_i32_89, %245 : i32
    %247 = arith.muli %arg0, %246 : i32
    %248 = arith.addi %c7_i32_87, %247 : i32
    %249 = arith.addi %9, %248 : i32
    %c8_i32_90 = arith.constant 8 : i32
    %250 = arith.cmpi slt, %249, %c8_i32_90 : i32
    %cst_91 = arith.constant dense<0.000000e+00> : vector<2x128xf32>
    %251 = tpu.matmul %240, %4, %cst_91 {dimension_numbers = #tpu.dot_dimension_numbers<[1], [0], [0], [1], [0, 0, 1, 1], [], []>} : vector<2x32xf32>, vector<32x128xf32>, vector<2x128xf32> -> vector<2x128xf32>
    %c0_92 = arith.constant 0 : index
    %252 = arith.index_cast %248 : i32 to index
    %c0_93 = arith.constant 0 : index
    %c0_94 = arith.constant 0 : index
    %253 = vector.load %arg2[%c0_92, %252, %c0_93, %c0_94] : memref<1x8x2x128xf32, #tpu.memory_space<vmem>>, vector<1x1x2x128xf32>
    %254 = vector.shape_cast %253 : vector<1x1x2x128xf32> to vector<2x128xf32>
    %255 = arith.addf %251, %254 : vector<2x128xf32>
    %256 = vector.extract_strided_slice %255 {offsets = [0, 0], sizes = [2, 96], strides = [1, 1]} : vector<2x128xf32> to vector<2x96xf32>
    %257 = arith.negf %256 : vector<2x96xf32>
    %258 = math.exp %257 : vector<2x96xf32>
    %cst_95 = arith.constant 1.000000e+00 : f32
    %259 = vector.broadcast %cst_95 : f32 to vector<2x96xf32>
    %260 = arith.addf %259, %258 : vector<2x96xf32>
    %261 = arith.divf %259, %260 : vector<2x96xf32>
    %262 = vector.extract_strided_slice %255 {offsets = [0, 96], sizes = [2, 32], strides = [1, 1]} : vector<2x128xf32> to vector<2x32xf32>
    %263 = math.tanh %262 : vector<2x32xf32>
    %264 = vector.extract_strided_slice %261 {offsets = [0, 0], sizes = [2, 32], strides = [1, 1]} : vector<2x96xf32> to vector<2x32xf32>
    %265 = vector.extract_strided_slice %261 {offsets = [0, 32], sizes = [2, 32], strides = [1, 1]} : vector<2x96xf32> to vector<2x32xf32>
    %266 = vector.extract_strided_slice %261 {offsets = [0, 64], sizes = [2, 32], strides = [1, 1]} : vector<2x96xf32> to vector<2x32xf32>
    %267 = arith.mulf %265, %239 : vector<2x32xf32>
    %268 = arith.mulf %264, %263 : vector<2x32xf32>
    %269 = arith.addf %267, %268 : vector<2x32xf32>
    %270 = math.tanh %269 : vector<2x32xf32>
    %271 = arith.mulf %266, %270 : vector<2x32xf32>
    %272 = arith.select %250, %269, %239 : vector<2x32xf32>
    %273 = arith.select %250, %271, %240 : vector<2x32xf32>
    %c0_96 = arith.constant 0 : index
    %274 = arith.index_cast %248 : i32 to index
    %c0_97 = arith.constant 0 : index
    %c0_98 = arith.constant 0 : index
    %275 = vector.load %arg4[%c0_96, %274, %c0_97, %c0_98] : memref<1x8x2x32xf32, #tpu.memory_space<vmem>>, vector<1x1x2x32xf32>
    %276 = vector.shape_cast %275 : vector<1x1x2x32xf32> to vector<2x32xf32>
    %277 = vector.shape_cast %273 : vector<2x32xf32> to vector<1x1x2x32xf32>
    tpu.vector_store %arg4[%c0_96, %274, %c0_97, %c0_98], %277 {strides = array<i32>} : memref<1x8x2x32xf32, #tpu.memory_space<vmem>>, vector<1x1x2x32xf32>,
    %c8_i32_99 = arith.constant 8 : i32
    %c0_100 = arith.constant 0 : index
    %c0_101 = arith.constant 0 : index
    %c0_102 = arith.constant 0 : index
    %278 = vector.load %arg5[%c0_100, %c0_101, %c0_102] : memref<1x2x32xf32, #tpu.memory_space<vmem>>, vector<1x2x32xf32>
    %279 = vector.shape_cast %278 : vector<1x2x32xf32> to vector<2x32xf32>
    %280 = vector.shape_cast %273 : vector<2x32xf32> to vector<1x2x32xf32>
    tpu.vector_store %arg5[%c0_100, %c0_101, %c0_102], %280 {strides = array<i32>} : memref<1x2x32xf32, #tpu.memory_space<vmem>>, vector<1x2x32xf32>,
    %c0_103 = arith.constant 0 : index
    %c0_104 = arith.constant 0 : index
    %c0_105 = arith.constant 0 : index
    %281 = vector.load %arg6[%c0_103, %c0_104, %c0_105] : memref<1x2x32xf32, #tpu.memory_space<vmem>>, vector<1x2x32xf32>
    %282 = vector.shape_cast %281 : vector<1x2x32xf32> to vector<2x32xf32>
    %283 = vector.shape_cast %272 : vector<2x32xf32> to vector<1x2x32xf32>
    tpu.vector_store %arg6[%c0_103, %c0_104, %c0_105], %283 {strides = array<i32>} : memref<1x2x32xf32, #tpu.memory_space<vmem>>, vector<1x2x32xf32>,
    return
  }
  func.func @transform_0(%arg0: i32, %arg1: i32) -> (i32, i32, i32, i32) {
    %c2_i32 = arith.constant 2 : i32
    %0 = arith.muli %c2_i32, %arg1 : i32
    %c0_i32 = arith.constant 0 : i32
    %1 = arith.subi %c0_i32, %0 : i32
    %2 = arith.muli %arg0, %1 : i32
    %3 = arith.addi %arg1, %2 : i32
    %c0_i32_0 = arith.constant 0 : i32
    %c0_i32_1 = arith.constant 0 : i32
    %c0_i32_2 = arith.constant 0 : i32
    return %arg0, %3, %c0_i32_0, %c0_i32_1 : i32, i32, i32, i32
  }
  func.func @transform_1(%arg0: i32, %arg1: i32) -> (i32, i32, i32) {
    %c0_i32 = arith.constant 0 : i32
    %c0_i32_0 = arith.constant 0 : i32
    %c0_i32_1 = arith.constant 0 : i32
    return %arg0, %c0_i32, %c0_i32_0 : i32, i32, i32
  }
  func.func @transform_2(%arg0: i32, %arg1: i32) -> (i32, i32, i32, i32) {
    %c2_i32 = arith.constant 2 : i32
    %0 = arith.muli %c2_i32, %arg1 : i32
    %c0_i32 = arith.constant 0 : i32
    %1 = arith.subi %c0_i32, %0 : i32
    %2 = arith.muli %arg0, %1 : i32
    %3 = arith.addi %arg1, %2 : i32
    %c0_i32_0 = arith.constant 0 : i32
    %c0_i32_1 = arith.constant 0 : i32
    %c0_i32_2 = arith.constant 0 : i32
    return %arg0, %3, %c0_i32_0, %c0_i32_1 : i32, i32, i32, i32
  }
  func.func @transform_3(%arg0: i32, %arg1: i32) -> (i32, i32, i32) {
    %c0_i32 = arith.constant 0 : i32
    %c0_i32_0 = arith.constant 0 : i32
    %c0_i32_1 = arith.constant 0 : i32
    return %arg0, %c0_i32, %c0_i32_0 : i32, i32, i32
  }
  func.func @transform_4(%arg0: i32, %arg1: i32) -> (i32, i32, i32) {
    %c0_i32 = arith.constant 0 : i32
    %c0_i32_0 = arith.constant 0 : i32
    %c0_i32_1 = arith.constant 0 : i32
    return %arg0, %c0_i32, %c0_i32_0 : i32, i32, i32
  }
}

</mosaic_0001>

<llo_original>
// kernel: rnn_layer_forward.2
$region0: #{rnn_layer_forward.2}
  #allocation0 [shape = 'u32[]', space=smem, size = 0x4, offset = 0x4, fixed_abs, tag = 'smem constant byte address 0x4 - core index']
  #allocation1 [shape = 'u32[144,128]{1,0:T(1,128)}', space=vmem, size = 0x12000, scoped, tag = 'internal scratch']
  %s0 = inlined_call_operand.vmem [shape: f32[2,8,2,128], index: 0, kind: input, shape index: {}]
  %s1 = inlined_call_operand.vmem [shape: f32[2,32,128], index: 1, kind: input, shape index: {}]
  %s2 = inlined_call_operand.vmem [shape: f32[2,8,2,32], index: 2, kind: output, shape index: {0}]
  %s3 = inlined_call_operand.vmem [shape: f32[2,2,32], index: 3, kind: output, shape index: {1}]
  %s4 = inlined_call_operand.vmem [shape: f32[2,2,32], index: 4, kind: output, shape index: {2}]
  %5 = xla_tuple %s2, %s3, %s4
  %s6 = sld [smem:[#allocation0]]
  $region61: #{rnn_layer_forward.2} parent=0
    _
  %s8 = ssub.s32 1, %s6
  %s9 = scalar_select 0, %s8, %s6
  loop: start=0, step=1, limit=4
  $region2: #{rnn_layer_forward.2} parent=0 // loop_pre_header
    _
  $region3: #{rnn_layer_forward.2} parent=0 // loop_header
    %s11 = sphi 0, %s15
    %p12 = scmp.ge.s32.totalorder %s11, 4
    %s18 = sphi 0, %s30
    %s19 = sphi 0, %s26
    %s20 = sphi 0, %s18
    %s21 = sphi 0, %s19
    %s22 = sphi 0, %s20
    %s23 = sphi 0, %s21
    %s43 = sphi 0, %s45
    %s46 = sphi 0, %s43
    %s47 = sphi 0, %s46
    %s63 = sphi 0, %s47
    %s69 = sphi 0, %s71
    %s72 = sphi 0, %s69
    %s73 = sphi 0, %s72
    %s89 = sphi 0, %s73
    %s105 = sphi 0, %s107
    %s108 = sphi 0, %s105
    %s109 = sphi 0, %s108
    %s125 = sphi 0, %s109
    %s131 = sphi 0, %s133
    %s134 = sphi 0, %s131
    %s135 = sphi 0, %s134
    %s151 = sphi 0, %s135
    %s157 = sphi 0, %s159
    %s160 = sphi 0, %s157
    %s161 = sphi 0, %s160
    %s177 = sphi 0, %s161
  $region4: #{rnn_layer_forward.2} parent=0 // loop_header_branch
    %14 = sbr.rel (%p12) target = $region8
  $region5: #{rnn_layer_forward.2} parent=0 // loop_body
    %s16 = ssub.s32 %s11, 1
    %s17 = ssub.s32 %s11, 2
    %s24 = sadd.s32 1, %s19
    %p25 = scmp.ge.s32.totalorder %s24, 1
    %s26 = scalar_select %p25, 0, %s24
    %s27 = sadd.s32 1, %s18
    %s28 = scalar_select %p25, %s27, %s18
    %p29 = scmp.ge.s32.totalorder %s28, 2
    %s30 = scalar_select %p29, 0, %s28
    %s31 = smul.u32 %s19, 2
    %s32 = ssub.s32 0, %s31
    %s33 = smul.u32 %s18, %s32
    %s34 = sadd.s32 %s19, %s33
    %s35 = smul.u32 %s26, 2
    %s36 = ssub.s32 0, %s35
    %s37 = smul.u32 %s30, %s36
    %s38 = sadd.s32 %s26, %s37
    %s39 = ssub.s32 %s18, %s30
    %s40 = ssub.s32 %s34, %s38
    %s41 = sor.u32 %s39, %s40
    %p42 = scmp.eq.s32.totalorder %s41, 0
    %s44 = sadd.s32 %s43, 1
    %s45 = scalar_select %p42, %s43, %s44
    %p48 = pneg %p42
    %p49 = scmp.eq.s32.totalorder %s11, 1
    %p50 = por %p48, %p49
    %p51 = scmp.ne.s32.totalorder %s43, %s46
    %p52 = scmp.eq.s32.totalorder %s11, 0
    %p53 = por %p51, %p52
    %p54 = scmp.ne.s32.totalorder %s43, %s46
    %p55 = scmp.eq.s32.totalorder %s16, 1
    %p56 = por %p54, %p55
    %p57 = scmp.ne.s32.totalorder %s46, %s47
    %p58 = scmp.eq.s32.totalorder %s16, 0
    %p59 = por %p57, %p58
    %p60 = scmp.ne.s32.totalorder %s46, %s47
    %p61 = scmp.eq.s32.totalorder %s17, 1
    %p62 = por %p60, %p61
    %p64 = scmp.ne.s32.totalorder %s47, %s63
    %p65 = scmp.eq.s32.totalorder %s17, 0
    %p66 = por %p64, %p65
    %s67 = ssub.s32 %s18, %s30
    %p68 = scmp.eq.s32.totalorder %s67, 0
    %s70 = sadd.s32 %s69, 1
    %s71 = scalar_select %p68, %s69, %s70
    %p74 = pneg %p68
    %p75 = scmp.eq.s32.totalorder %s11, 1
    %p76 = por %p74, %p75
    %p77 = scmp.ne.s32.totalorder %s69, %s72
    %p78 = scmp.eq.s32.totalorder %s11, 0
    %p79 = por %p77, %p78
    %p80 = scmp.ne.s32.totalorder %s69, %s72
    %p81 = scmp.eq.s32.totalorder %s16, 1
    %p82 = por %p80, %p81
    %p83 = scmp.ne.s32.totalorder %s72, %s73
    %p84 = scmp.eq.s32.totalorder %s16, 0
    %p85 = por %p83, %p84
    %p86 = scmp.ne.s32.totalorder %s72, %s73
    %p87 = scmp.eq.s32.totalorder %s17, 1
    %p88 = por %p86, %p87
    %p90 = scmp.ne.s32.totalorder %s73, %s89
    %p91 = scmp.eq.s32.totalorder %s17, 0
    %p92 = por %p90, %p91
    %s93 = smul.u32 %s19, 2
    %s94 = ssub.s32 0, %s93
    %s95 = smul.u32 %s18, %s94
    %s96 = sadd.s32 %s19, %s95
    %s97 = smul.u32 %s26, 2
    %s98 = ssub.s32 0, %s97
    %s99 = smul.u32 %s30, %s98
    %s100 = sadd.s32 %s26, %s99
    %s101 = ssub.s32 %s18, %s30
    %s102 = ssub.s32 %s96, %s100
    %s103 = sor.u32 %s101, %s102
    %p104 = scmp.eq.s32.totalorder %s103, 0
    %s106 = sadd.s32 %s105, 1
    %s107 = scalar_select %p104, %s105, %s106
    %p110 = pneg %p104
    %p111 = scmp.eq.s32.totalorder %s11, 1
    %p112 = por %p110, %p111
    %p113 = scmp.ne.s32.totalorder %s105, %s108
    %p114 = scmp.eq.s32.totalorder %s11, 0
    %p115 = por %p113, %p114
    %p116 = scmp.ne.s32.totalorder %s105, %s108
    %p117 = scmp.eq.s32.totalorder %s16, 1
    %p118 = por %p116, %p117
    %p119 = scmp.ne.s32.totalorder %s108, %s109
    %p120 = scmp.eq.s32.totalorder %s16, 0
    %p121 = por %p119, %p120
    %p122 = scmp.ne.s32.totalorder %s108, %s109
    %p123 = scmp.eq.s32.totalorder %s17, 1
    %p124 = por %p122, %p123
    %p126 = scmp.ne.s32.totalorder %s109, %s125
    %p127 = scmp.eq.s32.totalorder %s17, 0
    %p128 = por %p126, %p127
    %s129 = ssub.s32 %s18, %s30
    %p130 = scmp.eq.s32.totalorder %s129, 0
    %s132 = sadd.s32 %s131, 1
    %s133 = scalar_select %p130, %s131, %s132
    %p136 = pneg %p130
    %p137 = scmp.eq.s32.totalorder %s11, 1
    %p138 = por %p136, %p137
    %p139 = scmp.ne.s32.totalorder %s131, %s134
    %p140 = scmp.eq.s32.totalorder %s11, 0
    %p141 = por %p139, %p140
    %p142 = scmp.ne.s32.totalorder %s131, %s134
    %p143 = scmp.eq.s32.totalorder %s16, 1
    %p144 = por %p142, %p143
    %p145 = scmp.ne.s32.totalorder %s134, %s135
    %p146 = scmp.eq.s32.totalorder %s16, 0
    %p147 = por %p145, %p146
    %p148 = scmp.ne.s32.totalorder %s134, %s135
    %p149 = scmp.eq.s32.totalorder %s17, 1
    %p150 = por %p148, %p149
    %p152 = scmp.ne.s32.totalorder %s135, %s151
    %p153 = scmp.eq.s32.totalorder %s17, 0
    %p154 = por %p152, %p153
    %s155 = ssub.s32 %s18, %s30
    %p156 = scmp.eq.s32.totalorder %s155, 0
    %s158 = sadd.s32 %s157, 1
    %s159 = scalar_select %p156, %s157, %s158
    %p162 = pneg %p156
    %p163 = scmp.eq.s32.totalorder %s11, 1
    %p164 = por %p162, %p163
    %p165 = scmp.ne.s32.totalorder %s157, %s160
    %p166 = scmp.eq.s32.totalorder %s11, 0
    %p167 = por %p165, %p166
    %p168 = scmp.ne.s32.totalorder %s157, %s160
    %p169 = scmp.eq.s32.totalorder %s16, 1
    %p170 = por %p168, %p169
    %p171 = scmp.ne.s32.totalorder %s160, %s161
    %p172 = scmp.eq.s32.totalorder %s16, 0
    %p173 = por %p171, %p172
    %p174 = scmp.ne.s32.totalorder %s160, %s161
    %p175 = scmp.eq.s32.totalorder %s17, 1
    %p176 = por %p174, %p175
    %p178 = scmp.ne.s32.totalorder %s161, %s177
    %p179 = scmp.eq.s32.totalorder %s17, 0
    %p180 = por %p178, %p179
    %p181 = scmp.le.s32.totalorder 1, %s11
    %p182 = scmp.lt.s32.totalorder %s11, 3
    %p183 = pnand %p181, %p182
    %p184 = pneg %p183
    // Predicated region
    $region9: #{rnn_layer_forward.2} parent=5 // pred_check
      _
    $region10: #{rnn_layer_forward.2} parent=5 // pred_check_branch
      %186 = sbr.rel (%p183) target = $region12
    $region11: #{rnn_layer_forward.2} parent=5 // pred_region
      %s187 = ssub.s32 %s11, 1
    $region12: #{rnn_layer_forward.2} parent=5 // pred_fallthru
      _
    %p188 = scmp.lt.s32.totalorder %s11, 2
    // Predicated region
    $region13: #{rnn_layer_forward.2} parent=5 // pred_check
      %p189 = pneg %p188
    $region14: #{rnn_layer_forward.2} parent=5 // pred_check_branch
      %191 = sbr.rel (%p189) target = $region16
    $region15: #{rnn_layer_forward.2} parent=5 // pred_region
      // Predicated region
      $region17: #{rnn_layer_forward.2} parent=15 // pred_check
        %p192 = pneg %p53
      $region18: #{rnn_layer_forward.2} parent=15 // pred_check_branch
        %194 = sbr.rel (%p192) target = $region20
      $region19: #{rnn_layer_forward.2} parent=15 // pred_region
        %s195 = smul.u32 %s19, 2
        %s196 = ssub.s32 0, %s195
        %s197 = smul.u32 %s18, %s196
        %s198 = sadd.s32 %s19, %s197
        %s199 = smul.u32 8, %s198
        %p200 = scmp.lt.s32.totalorder %s18, 1
        %s201 = scalar_select %p200, %s18, 1
        %p202 = scmp.lt.s32.totalorder %s199, 7
        %s203 = scalar_select %p202, %s199, 7
        %s204 = smul.addr %s201, 8
        %s205 = sadd.s32 %s203, %s204
        %s206 = smul.addr %s205, 2
        %s207 = scalar_lea.vmem %s0, %s206
        %s208 = smul.u32 %s19, 2
        %s209 = ssub.s32 0, %s208
        %s210 = smul.u32 %s18, %s209
        %s211 = sadd.s32 %s19, %s210
        %s212 = smul.u32 8, %s211
      $region20: #{rnn_layer_forward.2} parent=15 // pred_fallthru
        _
      // Predicated region
      $region21: #{rnn_layer_forward.2} parent=15 // pred_check
        %p213 = pneg %p79
      $region22: #{rnn_layer_forward.2} parent=15 // pred_check_branch
        %215 = sbr.rel (%p213) target = $region24
      $region23: #{rnn_layer_forward.2} parent=15 // pred_region
        %p216 = scmp.lt.s32.totalorder %s18, 1
        %s217 = scalar_select %p216, %s18, 1
        %s218 = smul.addr %s217, 4
        %s219 = smul.addr %s218, 8
        %s220 = scalar_lea.vmem %s1, %s219
      $region24: #{rnn_layer_forward.2} parent=15 // pred_fallthru
        _
    $region16: #{rnn_layer_forward.2} parent=5 // pred_fallthru
      _
    %p221 = scmp.le.s32.totalorder 1, %s11
    %p222 = scmp.lt.s32.totalorder %s11, 3
    %p223 = pnand %p221, %p222
    %p224 = pneg %p223
    // Predicated region
    $region25: #{rnn_layer_forward.2} parent=5 // pred_check
      _
    $region26: #{rnn_layer_forward.2} parent=5 // pred_check_branch
      %226 = sbr.rel (%p223) target = $region28
    $region27: #{rnn_layer_forward.2} parent=5 // pred_region
      %s227 = ssub.s32 %s11, 1
      %s228 = smul.u32 %s21, 2
      %s229 = ssub.s32 0, %s228
      %s230 = smul.u32 %s20, %s229
      %s231 = sadd.s32 %s21, %s230
      %s232 = smul.u32 8, %s231
      %p233 = scmp.lt.s32.totalorder %s20, 1
      %s234 = scalar_select %p233, %s20, 1
      %p235 = scmp.lt.s32.totalorder %s232, 7
      %s236 = scalar_select %p235, %s232, 7
      %s237 = smul.addr %s234, 8
      %s238 = sadd.s32 %s236, %s237
      %s239 = smul.addr %s238, 2
      %s240 = scalar_lea.vmem %s0, %s239
      %p241 = pneg %p59
      %p242 = pneg %p56
      %p243 = scmp.lt.s32.totalorder %s20, 1
      %s244 = scalar_select %p243, %s20, 1
      %s245 = smul.addr %s244, 4
      %s246 = smul.addr %s245, 8
      %s247 = scalar_lea.vmem %s1, %s246
      %p248 = pneg %p85
      %p249 = pneg %p82
      %p250 = pneg %p121
      %p251 = pneg %p118
      %s252 = smul.u32 %s21, 2
      %s253 = ssub.s32 0, %s252
      %s254 = smul.u32 %s20, %s253
      %s255 = sadd.s32 %s21, %s254
      %s256 = smul.u32 8, %s255
      %p257 = scmp.lt.s32.totalorder %s20, 1
      %s258 = scalar_select %p257, %s20, 1
      %p259 = scmp.lt.s32.totalorder %s256, 7
      %s260 = scalar_select %p259, %s256, 7
      %s261 = smul.addr %s258, 8
      %s262 = sadd.s32 %s260, %s261
      %s263 = smul.addr %s262, 2
      %s264 = scalar_lea.vmem %s2, %s263
      %p265 = pneg %p147
      %p266 = pneg %p144
      %p267 = scmp.lt.s32.totalorder %s20, 1
      %s268 = scalar_select %p267, %s20, 1
      %s269 = smul.addr %s268, 2
      %s270 = scalar_lea.vmem %s3, %s269
      %p271 = pneg %p173
      %p272 = pneg %p170
      %p273 = scmp.lt.s32.totalorder %s20, 1
      %s274 = scalar_select %p273, %s20, 1
      %s275 = smul.addr %s274, 2
      %s276 = scalar_lea.vmem %s4, %s275
      %s277 = smul.u32 %s21, 2
      %s278 = ssub.s32 0, %s277
      %s279 = smul.u32 %s20, %s278
      %s280 = sadd.s32 %s21, %s279
      %s281 = smul.u32 8, %s280
      %p282 = scmp.lt.s32.totalorder %s20, 1
      %s283 = scalar_select %p282, %s20, 1
      %p284 = scmp.lt.s32.totalorder %s281, 7
      %s285 = scalar_select %p284, %s281, 7
      %s286 = smul.addr %s283, 8
      %s287 = sadd.s32 %s285, %s286
      %s288 = smul.addr %s287, 2
      %s289 = scalar_lea.vmem %s0, %s288
      %s290 = smul.u32 %s21, 2
      %s291 = ssub.s32 0, %s290
      %s292 = smul.u32 %s20, %s291
      %s293 = sadd.s32 %s21, %s292
      %s294 = smul.u32 8, %s293
      %p295 = scmp.lt.s32.totalorder %s20, 1
      %s296 = scalar_select %p295, %s20, 1
      %s297 = smul.addr %s296, 4
      %s298 = smul.addr %s297, 8
      %s299 = scalar_lea.vmem %s1, %s298
      %s300 = smul.u32 %s21, 2
      %s301 = ssub.s32 0, %s300
      %s302 = smul.u32 %s20, %s301
      %s303 = sadd.s32 %s21, %s302
      %s304 = smul.u32 8, %s303
      %p305 = scmp.lt.s32.totalorder %s20, 1
      %s306 = scalar_select %p305, %s20, 1
      %p307 = scmp.lt.s32.totalorder %s304, 7
      %s308 = scalar_select %p307, %s304, 7
      %s309 = smul.addr %s306, 8
      %s310 = sadd.s32 %s308, %s309
      %s311 = smul.addr %s310, 2
      %s312 = scalar_lea.vmem %s2, %s311
      %s313 = smul.u32 %s21, 2
      %s314 = ssub.s32 0, %s313
      %s315 = smul.u32 %s20, %s314
      %s316 = sadd.s32 %s21, %s315
      %s317 = smul.u32 8, %s316
      %p318 = scmp.lt.s32.totalorder %s20, 1
      %s319 = scalar_select %p318, %s20, 1
      %s320 = smul.addr %s319, 2
      %s321 = scalar_lea.vmem %s3, %s320
      %p322 = scmp.lt.s32.totalorder %s20, 1
      %s323 = scalar_select %p322, %s20, 1
      %s324 = smul.addr %s323, 2
      %s325 = scalar_lea.vmem %s4, %s324
      %p326 = scmp.eq.s32.totalorder %s21, 0
      // Predicated region
      $region29: #{rnn_layer_forward.2} parent=27 // pred_check
        %p327 = pneg %p326
      $region30: #{rnn_layer_forward.2} parent=27 // pred_check_branch
        %329 = sbr.rel (%p327) target = $region32
      $region31: #{rnn_layer_forward.2} parent=27 // pred_region
        %vm330 = vcmask 254976
        %331 = vst.msk [vmem:[%s321] sm:$0x3] %vm330, 0.0
        %332 = vst.msk [vmem:[%s325] sm:$0x3] %vm330, 0.0
      $region32: #{rnn_layer_forward.2} parent=27 // pred_fallthru
        _
      %v333 = vld [vmem:[%s299] sm:$0xff]
      %v334 = vld [vmem:[%s299 + $0x8] sm:$0xff]
      %v335 = vld [vmem:[%s299 + $0x10] sm:$0xff]
      %v336 = vld [vmem:[%s299 + $0x18] sm:$0xff]
      %s337 = smul.u32 %s21, 2
      %s338 = ssub.s32 0, %s337
      %s339 = smul.u32 %s20, %s338
      %s340 = sadd.s32 %s21, %s339
      %s341 = smul.u32 %s340, 8
      %v342 = vld [vmem:[%s321] sm:$0x3]
      %v343 = vld [vmem:[%s325] sm:$0x3]
      %s344 = smul.u32 %s20, 7
      %s345 = sadd.s32 %s341, %s344
      %p346 = scmp.lt.s32.totalorder %s345, 8
      %s347 = smul.u32 %s344, 2
      %s348 = scalar_lea.vmem %s289, %s347
      %v349 = vld [vmem:[%s348] sm:$0x3]
      %vm350 = vcmask 261120
      %v352 = vsel %vm350, %v342, 0
      %354 = vmatprep.subr.mxu0 0.0
      %355 = vmatpush1.msra.mxu0 0.0
      %356 = vmatprep.subr.mxu0 0.0
      %357 = vmatpush1.msra.mxu0 0.0
      %358 = vmatprep.subr.mxu0 0.0
      %359 = vmatpush1.msra.mxu0 0.0
      %360 = vmatprep.subr.mxu0 0.0
      %361 = vmatpush1.msra.mxu0 0.0
      %362 = vmatprep.subr.mxu0 0.0
      %363 = vmatpush1.msra.mxu0 0.0
      %364 = vmatprep.subr.mxu0 0.0
      %365 = vmatpush1.msra.mxu0 0.0
      %366 = vmatprep.subr.mxu0 0.0
      %367 = vmatpush1.msra.mxu0 0.0
      %368 = vmatprep.subr.mxu0 0.0
      %369 = vmatpush1.msra.mxu0 0.0
      %370 = vmatprep.subr.mxu0 0.0
      %371 = vmatpush1.msra.mxu0 0.0
      %372 = vmatprep.subr.mxu0 0.0
      %373 = vmatpush1.msra.mxu0 0.0
      %374 = vmatprep.subr.mxu0 0.0
      %375 = vmatpush1.msra.mxu0 0.0
      %376 = vmatprep.subr.mxu0 0.0
      %377 = vmatpush1.msra.mxu0 0.0
      %378 = vmatprep.subr.mxu0 0.0
      %379 = vmatpush1.msra.mxu0 %v336
      %380 = vmatprep.subr.mxu0 0.0
      %381 = vmatpush1.msra.mxu0 %v335
      %382 = vmatprep.subr.mxu0 0.0
      %383 = vmatpush1.msra.mxu0 %v334
      %384 = vmatprep.subr.mxu0 0.0
      %385 = vmatpush1.msra.mxu0 %v333
      %386 = vmatprep.subr.mxu0 0.0
      %387 = vmatpush2.msra.mxu0 0.0
      %388 = vmatprep.subr.mxu0 0.0
      %389 = vmatpush2.msra.mxu0 0.0
      %390 = vmatprep.subr.mxu0 0.0
      %391 = vmatpush2.msra.mxu0 0.0
      %392 = vmatprep.subr.mxu0 0.0
      %393 = vmatpush2.msra.mxu0 0.0
      %394 = vmatprep.subr.mxu0 0.0
      %395 = vmatpush2.msra.mxu0 0.0
      %396 = vmatprep.subr.mxu0 0.0
      %397 = vmatpush2.msra.mxu0 0.0
      %398 = vmatprep.subr.mxu0 0.0
      %399 = vmatpush2.msra.mxu0 0.0
      %400 = vmatprep.subr.mxu0 0.0
      %401 = vmatpush2.msra.mxu0 0.0
      %402 = vmatprep.subr.mxu0 0.0
      %403 = vmatpush2.msra.mxu0 0.0
      %404 = vmatprep.subr.mxu0 0.0
      %405 = vmatpush2.msra.mxu0 0.0
      %406 = vmatprep.subr.mxu0 0.0
      %407 = vmatpush2.msra.mxu0 0.0
      %408 = vmatprep.subr.mxu0 0.0
      %409 = vmatpush2.msra.mxu0 0.0
      %410 = vmatprep.subr.mxu0 0.0
      %411 = vmatpush2.msra.mxu0 0.0
      %412 = vmatprep.subr.mxu0 0.0
      %413 = vmatpush2.msra.mxu0 0.0
      %414 = vmatprep.subr.mxu0 0.0
      %415 = vmatpush2.msra.mxu0 0.0
      %416 = vmatprep.subr.mxu0 0.0
      %417 = vmatpush2.msra.mxu0 0.0
      %418 = vmatprep.mubr.f32.mxu0 0.0
      %419 = vmatmul.mubr.f32.gmra.mxu0 %v352
      %v420 = vpop.f32.mrf.mxu0
      %v421 = vadd.f32 %v349, %v420
      %v422 = vpop.f32.mrf.mxu0
      %423 = vdwg.mxu0
      %v424 = vxor.u32 %v421, 2147483648
      %v425 = vmul.f32 %v424, 1.442695
      %v426 = vpow.pop %v425
      %v427 = vadd.f32 %v426, 1.0
      %v428 = vrcp.pop %v427
      %v429 = vmul.f32 1.0, %v428
      %v430 = vtanh.pop %v421
      %432 = vrot.lane.b32.xlu0 %v343, 32
      %v433 = vpop.permute.xlu0 %432
      %v435 = vmul.f32 %v429, %v433
      %437 = vrot.lane.b32.xlu0 %v430, 32
      %v438 = vpop.permute.xlu0 %437
      %v440 = vmul.f32 %v429, %v438
      %442 = vrot.lane.b32.xlu0 %v440, 32
      %v443 = vpop.permute.xlu0 %442
      %v445 = vadd.f32 %v435, %v443
      %v446 = vtanh.pop %v445
      %448 = vrot.lane.b32.xlu0 %v446, 32
      %v449 = vpop.permute.xlu0 %448
      %v451 = vmul.f32 %v429, %v449
      %s452 = scalar_select %p346, 1, 0
      %v453 = vstv %s452
      %vm454 = vcmp.eq.s32.totalorder %v453, 1
      %v455 = vsel %vm454, %v445, %v433
      %456 = vrot.lane.b32.xlu0 %v342, 64
      %v457 = vpop.permute.xlu0 %456
      %v459 = vsel %vm454, %v451, %v457
      %461 = vrot.lane.b32.xlu0 %v459, 64
      %v462 = vpop.permute.xlu0 %461
      %s464 = scalar_lea.vmem %s312, %s347
      %vm465 = vcmask 254976
      %466 = vst.msk [vmem:[%s464] sm:$0x3] %vm465, %v462
      %s467 = smul.u32 %s20, 5
      %s468 = sadd.s32 %s467, 1
      %s469 = sadd.s32 %s341, %s468
      %p470 = scmp.lt.s32.totalorder %s469, 8
      %s471 = smul.u32 %s468, 2
      %s472 = scalar_lea.vmem %s289, %s471
      %v473 = vld [vmem:[%s472] sm:$0x3]
      %v474 = vsel %vm350, %v462, 0
      %476 = vmatprep.subr.mxu0 0.0
      %477 = vmatpush1.msra.mxu0 0.0
      %478 = vmatprep.subr.mxu0 0.0
      %479 = vmatpush1.msra.mxu0 0.0
      %480 = vmatprep.subr.mxu0 0.0
      %481 = vmatpush1.msra.mxu0 0.0
      %482 = vmatprep.subr.mxu0 0.0
      %483 = vmatpush1.msra.mxu0 0.0
      %484 = vmatprep.subr.mxu0 0.0
      %485 = vmatpush1.msra.mxu0 0.0
      %486 = vmatprep.subr.mxu0 0.0
      %487 = vmatpush1.msra.mxu0 0.0
      %488 = vmatprep.subr.mxu0 0.0
      %489 = vmatpush1.msra.mxu0 0.0
      %490 = vmatprep.subr.mxu0 0.0
      %491 = vmatpush1.msra.mxu0 0.0
      %492 = vmatprep.subr.mxu0 0.0
      %493 = vmatpush1.msra.mxu0 0.0
      %494 = vmatprep.subr.mxu0 0.0
      %495 = vmatpush1.msra.mxu0 0.0
      %496 = vmatprep.subr.mxu0 0.0
      %497 = vmatpush1.msra.mxu0 0.0
      %498 = vmatprep.subr.mxu0 0.0
      %499 = vmatpush1.msra.mxu0 0.0
      %500 = vmatprep.subr.mxu0 0.0
      %501 = vmatpush1.msra.mxu0 %v336
      %502 = vmatprep.subr.mxu0 0.0
      %503 = vmatpush1.msra.mxu0 %v335
      %504 = vmatprep.subr.mxu0 0.0
      %505 = vmatpush1.msra.mxu0 %v334
      %506 = vmatprep.subr.mxu0 0.0
      %507 = vmatpush1.msra.mxu0 %v333
      %508 = vmatprep.subr.mxu0 0.0
      %509 = vmatpush2.msra.mxu0 0.0
      %510 = vmatprep.subr.mxu0 0.0
      %511 = vmatpush2.msra.mxu0 0.0
      %512 = vmatprep.subr.mxu0 0.0
      %513 = vmatpush2.msra.mxu0 0.0
      %514 = vmatprep.subr.mxu0 0.0
      %515 = vmatpush2.msra.mxu0 0.0
      %516 = vmatprep.subr.mxu0 0.0
      %517 = vmatpush2.msra.mxu0 0.0
      %518 = vmatprep.subr.mxu0 0.0
      %519 = vmatpush2.msra.mxu0 0.0
      %520 = vmatprep.subr.mxu0 0.0
      %521 = vmatpush2.msra.mxu0 0.0
      %522 = vmatprep.subr.mxu0 0.0
      %523 = vmatpush2.msra.mxu0 0.0
      %524 = vmatprep.subr.mxu0 0.0
      %525 = vmatpush2.msra.mxu0 0.0
      %526 = vmatprep.subr.mxu0 0.0
      %527 = vmatpush2.msra.mxu0 0.0
      %528 = vmatprep.subr.mxu0 0.0
      %529 = vmatpush2.msra.mxu0 0.0
      %530 = vmatprep.subr.mxu0 0.0
      %531 = vmatpush2.msra.mxu0 0.0
      %532 = vmatprep.subr.mxu0 0.0
      %533 = vmatpush2.msra.mxu0 0.0
      %534 = vmatprep.subr.mxu0 0.0
      %535 = vmatpush2.msra.mxu0 0.0
      %536 = vmatprep.subr.mxu0 0.0
      %537 = vmatpush2.msra.mxu0 0.0
      %538 = vmatprep.subr.mxu0 0.0
      %539 = vmatpush2.msra.mxu0 0.0
      %540 = vmatprep.mubr.f32.mxu0 0.0
      %541 = vmatmul.mubr.f32.gmra.mxu0 %v474
      %v542 = vpop.f32.mrf.mxu0
      %v543 = vadd.f32 %v473, %v542
      %v544 = vpop.f32.mrf.mxu0
      %545 = vdwg.mxu0
      %v546 = vxor.u32 %v543, 2147483648
      %v547 = vmul.f32 %v546, 1.442695
      %v548 = vpow.pop %v547
      %v549 = vadd.f32 %v548, 1.0
      %v550 = vrcp.pop %v549
      %v551 = vmul.f32 1.0, %v550
      %v552 = vtanh.pop %v543
      %v553 = vmul.f32 %v551, %v455
      %555 = vrot.lane.b32.xlu0 %v552, 32
      %v556 = vpop.permute.xlu0 %555
      %v558 = vmul.f32 %v551, %v556
      %560 = vrot.lane.b32.xlu0 %v558, 32
      %v561 = vpop.permute.xlu0 %560
      %v563 = vadd.f32 %v553, %v561
      %v564 = vtanh.pop %v563
      %566 = vrot.lane.b32.xlu0 %v564, 32
      %v567 = vpop.permute.xlu0 %566
      %v569 = vmul.f32 %v551, %v567
      %s570 = scalar_select %p470, 1, 0
      %v571 = vstv %s570
      %vm572 = vcmp.eq.s32.totalorder %v571, 1
      %v573 = vsel %vm572, %v563, %v455
      %v574 = vsel %vm572, %v569, %v459
      %576 = vrot.lane.b32.xlu0 %v574, 64
      %v577 = vpop.permute.xlu0 %576
      %s579 = scalar_lea.vmem %s312, %s471
      %580 = vst.msk [vmem:[%s579] sm:$0x3] %vm465, %v577
      %s581 = smul.u32 %s20, 3
      %s582 = sadd.s32 %s581, 2
      %s583 = sadd.s32 %s341, %s582
      %p584 = scmp.lt.s32.totalorder %s583, 8
      %s585 = smul.u32 %s582, 2
      %s586 = scalar_lea.vmem %s289, %s585
      %v587 = vld [vmem:[%s586] sm:$0x3]
      %v588 = vsel %vm350, %v577, 0
      %590 = vmatprep.subr.mxu0 0.0
      %591 = vmatpush1.msra.mxu0 0.0
      %592 = vmatprep.subr.mxu0 0.0
      %593 = vmatpush1.msra.mxu0 0.0
      %594 = vmatprep.subr.mxu0 0.0
      %595 = vmatpush1.msra.mxu0 0.0
      %596 = vmatprep.subr.mxu0 0.0
      %597 = vmatpush1.msra.mxu0 0.0
      %598 = vmatprep.subr.mxu0 0.0
      %599 = vmatpush1.msra.mxu0 0.0
      %600 = vmatprep.subr.mxu0 0.0
      %601 = vmatpush1.msra.mxu0 0.0
      %602 = vmatprep.subr.mxu0 0.0
      %603 = vmatpush1.msra.mxu0 0.0
      %604 = vmatprep.subr.mxu0 0.0
      %605 = vmatpush1.msra.mxu0 0.0
      %606 = vmatprep.subr.mxu0 0.0
      %607 = vmatpush1.msra.mxu0 0.0
      %608 = vmatprep.subr.mxu0 0.0
      %609 = vmatpush1.msra.mxu0 0.0
      %610 = vmatprep.subr.mxu0 0.0
      %611 = vmatpush1.msra.mxu0 0.0
      %612 = vmatprep.subr.mxu0 0.0
      %613 = vmatpush1.msra.mxu0 0.0
      %614 = vmatprep.subr.mxu0 0.0
      %615 = vmatpush1.msra.mxu0 %v336
      %616 = vmatprep.subr.mxu0 0.0
      %617 = vmatpush1.msra.mxu0 %v335
      %618 = vmatprep.subr.mxu0 0.0
      %619 = vmatpush1.msra.mxu0 %v334
      %620 = vmatprep.subr.mxu0 0.0
      %621 = vmatpush1.msra.mxu0 %v333
      %622 = vmatprep.subr.mxu0 0.0
      %623 = vmatpush2.msra.mxu0 0.0
      %624 = vmatprep.subr.mxu0 0.0
      %625 = vmatpush2.msra.mxu0 0.0
      %626 = vmatprep.subr.mxu0 0.0
      %627 = vmatpush2.msra.mxu0 0.0
      %628 = vmatprep.subr.mxu0 0.0
      %629 = vmatpush2.msra.mxu0 0.0
      %630 = vmatprep.subr.mxu0 0.0
      %631 = vmatpush2.msra.mxu0 0.0
      %632 = vmatprep.subr.mxu0 0.0
      %633 = vmatpush2.msra.mxu0 0.0
      %634 = vmatprep.subr.mxu0 0.0
      %635 = vmatpush2.msra.mxu0 0.0
      %636 = vmatprep.subr.mxu0 0.0
      %637 = vmatpush2.msra.mxu0 0.0
      %638 = vmatprep.subr.mxu0 0.0
      %639 = vmatpush2.msra.mxu0 0.0
      %640 = vmatprep.subr.mxu0 0.0
      %641 = vmatpush2.msra.mxu0 0.0
      %642 = vmatprep.subr.mxu0 0.0
      %643 = vmatpush2.msra.mxu0 0.0
      %644 = vmatprep.subr.mxu0 0.0
      %645 = vmatpush2.msra.mxu0 0.0
      %646 = vmatprep.subr.mxu0 0.0
      %647 = vmatpush2.msra.mxu0 0.0
      %648 = vmatprep.subr.mxu0 0.0
      %649 = vmatpush2.msra.mxu0 0.0
      %650 = vmatprep.subr.mxu0 0.0
      %651 = vmatpush2.msra.mxu0 0.0
      %652 = vmatprep.subr.mxu0 0.0
      %653 = vmatpush2.msra.mxu0 0.0
      %654 = vmatprep.mubr.f32.mxu0 0.0
      %655 = vmatmul.mubr.f32.gmra.mxu0 %v588
      %v656 = vpop.f32.mrf.mxu0
      %v657 = vadd.f32 %v587, %v656
      %v658 = vpop.f32.mrf.mxu0
      %659 = vdwg.mxu0
      %v660 = vxor.u32 %v657, 2147483648
      %v661 = vmul.f32 %v660, 1.442695
      %v662 = vpow.pop %v661
      %v663 = vadd.f32 %v662, 1.0
      %v664 = vrcp.pop %v663
      %v665 = vmul.f32 1.0, %v664
      %v666 = vtanh.pop %v657
      %v667 = vmul.f32 %v665, %v573
      %669 = vrot.lane.b32.xlu0 %v666, 32
      %v670 = vpop.permute.xlu0 %669
      %v672 = vmul.f32 %v665, %v670
      %674 = vrot.lane.b32.xlu0 %v672, 32
      %v675 = vpop.permute.xlu0 %674
      %v677 = vadd.f32 %v667, %v675
      %v678 = vtanh.pop %v677
      %680 = vrot.lane.b32.xlu0 %v678, 32
      %v681 = vpop.permute.xlu0 %680
      %v683 = vmul.f32 %v665, %v681
      %s684 = scalar_select %p584, 1, 0
      %v685 = vstv %s684
      %vm686 = vcmp.eq.s32.totalorder %v685, 1
      %v687 = vsel %vm686, %v677, %v573
      %v688 = vsel %vm686, %v683, %v574
      %690 = vrot.lane.b32.xlu0 %v688, 64
      %v691 = vpop.permute.xlu0 %690
      %s693 = scalar_lea.vmem %s312, %s585
      %694 = vst.msk [vmem:[%s693] sm:$0x3] %vm465, %v691
      %s695 = sadd.s32 %s20, 3
      %s696 = sadd.s32 %s341, %s695
      %p697 = scmp.lt.s32.totalorder %s696, 8
      %s698 = smul.u32 %s695, 2
      %s699 = scalar_lea.vmem %s289, %s698
      %v700 = vld [vmem:[%s699] sm:$0x3]
      %v701 = vsel %vm350, %v691, 0
      %703 = vmatprep.subr.mxu0 0.0
      %704 = vmatpush1.msra.mxu0 0.0
      %705 = vmatprep.subr.mxu0 0.0
      %706 = vmatpush1.msra.mxu0 0.0
      %707 = vmatprep.subr.mxu0 0.0
      %708 = vmatpush1.msra.mxu0 0.0
      %709 = vmatprep.subr.mxu0 0.0
      %710 = vmatpush1.msra.mxu0 0.0
      %711 = vmatprep.subr.mxu0 0.0
      %712 = vmatpush1.msra.mxu0 0.0
      %713 = vmatprep.subr.mxu0 0.0
      %714 = vmatpush1.msra.mxu0 0.0
      %715 = vmatprep.subr.mxu0 0.0
      %716 = vmatpush1.msra.mxu0 0.0
      %717 = vmatprep.subr.mxu0 0.0
      %718 = vmatpush1.msra.mxu0 0.0
      %719 = vmatprep.subr.mxu0 0.0
      %720 = vmatpush1.msra.mxu0 0.0
      %721 = vmatprep.subr.mxu0 0.0
      %722 = vmatpush1.msra.mxu0 0.0
      %723 = vmatprep.subr.mxu0 0.0
      %724 = vmatpush1.msra.mxu0 0.0
      %725 = vmatprep.subr.mxu0 0.0
      %726 = vmatpush1.msra.mxu0 0.0
      %727 = vmatprep.subr.mxu0 0.0
      %728 = vmatpush1.msra.mxu0 %v336
      %729 = vmatprep.subr.mxu0 0.0
      %730 = vmatpush1.msra.mxu0 %v335
      %731 = vmatprep.subr.mxu0 0.0
      %732 = vmatpush1.msra.mxu0 %v334
      %733 = vmatprep.subr.mxu0 0.0
      %734 = vmatpush1.msra.mxu0 %v333
      %735 = vmatprep.subr.mxu0 0.0
      %736 = vmatpush2.msra.mxu0 0.0
      %737 = vmatprep.subr.mxu0 0.0
      %738 = vmatpush2.msra.mxu0 0.0
      %739 = vmatprep.subr.mxu0 0.0
      %740 = vmatpush2.msra.mxu0 0.0
      %741 = vmatprep.subr.mxu0 0.0
      %742 = vmatpush2.msra.mxu0 0.0
      %743 = vmatprep.subr.mxu0 0.0
      %744 = vmatpush2.msra.mxu0 0.0
      %745 = vmatprep.subr.mxu0 0.0
      %746 = vmatpush2.msra.mxu0 0.0
      %747 = vmatprep.subr.mxu0 0.0
      %748 = vmatpush2.msra.mxu0 0.0
      %749 = vmatprep.subr.mxu0 0.0
      %750 = vmatpush2.msra.mxu0 0.0
      %751 = vmatprep.subr.mxu0 0.0
      %752 = vmatpush2.msra.mxu0 0.0
      %753 = vmatprep.subr.mxu0 0.0
      %754 = vmatpush2.msra.mxu0 0.0
      %755 = vmatprep.subr.mxu0 0.0
      %756 = vmatpush2.msra.mxu0 0.0
      %757 = vmatprep.subr.mxu0 0.0
      %758 = vmatpush2.msra.mxu0 0.0
      %759 = vmatprep.subr.mxu0 0.0
      %760 = vmatpush2.msra.mxu0 0.0
      %761 = vmatprep.subr.mxu0 0.0
      %762 = vmatpush2.msra.mxu0 0.0
      %763 = vmatprep.subr.mxu0 0.0
      %764 = vmatpush2.msra.mxu0 0.0
      %765 = vmatprep.subr.mxu0 0.0
      %766 = vmatpush2.msra.mxu0 0.0
      %767 = vmatprep.mubr.f32.mxu0 0.0
      %768 = vmatmul.mubr.f32.gmra.mxu0 %v701
      %v769 = vpop.f32.mrf.mxu0
      %v770 = vadd.f32 %v700, %v769
      %v771 = vpop.f32.mrf.mxu0
      %772 = vdwg.mxu0
      %v773 = vxor.u32 %v770, 2147483648
      %v774 = vmul.f32 %v773, 1.442695
      %v775 = vpow.pop %v774
      %v776 = vadd.f32 %v775, 1.0
      %v777 = vrcp.pop %v776
      %v778 = vmul.f32 1.0, %v777
      %v779 = vtanh.pop %v770
      %v780 = vmul.f32 %v778, %v687
      %782 = vrot.lane.b32.xlu0 %v779, 32
      %v783 = vpop.permute.xlu0 %782
      %v785 = vmul.f32 %v778, %v783
      %787 = vrot.lane.b32.xlu0 %v785, 32
      %v788 = vpop.permute.xlu0 %787
      %v790 = vadd.f32 %v780, %v788
      %v791 = vtanh.pop %v790
      %793 = vrot.lane.b32.xlu0 %v791, 32
      %v794 = vpop.permute.xlu0 %793
      %v796 = vmul.f32 %v778, %v794
      %s797 = scalar_select %p697, 1, 0
      %v798 = vstv %s797
      %vm799 = vcmp.eq.s32.totalorder %v798, 1
      %v800 = vsel %vm799, %v790, %v687
      %v801 = vsel %vm799, %v796, %v688
      %803 = vrot.lane.b32.xlu0 %v801, 64
      %v804 = vpop.permute.xlu0 %803
      %s806 = scalar_lea.vmem %s312, %s698
      %807 = vst.msk [vmem:[%s806] sm:$0x3] %vm465, %v804
      %s808 = ssub.s32 4, %s20
      %s809 = sadd.s32 %s341, %s808
      %p810 = scmp.lt.s32.totalorder %s809, 8
      %s811 = smul.u32 %s808, 2
      %s812 = scalar_lea.vmem %s289, %s811
      %v813 = vld [vmem:[%s812] sm:$0x3]
      %v814 = vsel %vm350, %v804, 0
      %816 = vmatprep.subr.mxu0 0.0
      %817 = vmatpush1.msra.mxu0 0.0
      %818 = vmatprep.subr.mxu0 0.0
      %819 = vmatpush1.msra.mxu0 0.0
      %820 = vmatprep.subr.mxu0 0.0
      %821 = vmatpush1.msra.mxu0 0.0
      %822 = vmatprep.subr.mxu0 0.0
      %823 = vmatpush1.msra.mxu0 0.0
      %824 = vmatprep.subr.mxu0 0.0
      %825 = vmatpush1.msra.mxu0 0.0
      %826 = vmatprep.subr.mxu0 0.0
      %827 = vmatpush1.msra.mxu0 0.0
      %828 = vmatprep.subr.mxu0 0.0
      %829 = vmatpush1.msra.mxu0 0.0
      %830 = vmatprep.subr.mxu0 0.0
      %831 = vmatpush1.msra.mxu0 0.0
      %832 = vmatprep.subr.mxu0 0.0
      %833 = vmatpush1.msra.mxu0 0.0
      %834 = vmatprep.subr.mxu0 0.0
      %835 = vmatpush1.msra.mxu0 0.0
      %836 = vmatprep.subr.mxu0 0.0
      %837 = vmatpush1.msra.mxu0 0.0
      %838 = vmatprep.subr.mxu0 0.0
      %839 = vmatpush1.msra.mxu0 0.0
      %840 = vmatprep.subr.mxu0 0.0
      %841 = vmatpush1.msra.mxu0 %v336
      %842 = vmatprep.subr.mxu0 0.0
      %843 = vmatpush1.msra.mxu0 %v335
      %844 = vmatprep.subr.mxu0 0.0
      %845 = vmatpush1.msra.mxu0 %v334
      %846 = vmatprep.subr.mxu0 0.0
      %847 = vmatpush1.msra.mxu0 %v333
      %848 = vmatprep.subr.mxu0 0.0
      %849 = vmatpush2.msra.mxu0 0.0
      %850 = vmatprep.subr.mxu0 0.0
      %851 = vmatpush2.msra.mxu0 0.0
      %852 = vmatprep.subr.mxu0 0.0
      %853 = vmatpush2.msra.mxu0 0.0
      %854 = vmatprep.subr.mxu0 0.0
      %855 = vmatpush2.msra.mxu0 0.0
      %856 = vmatprep.subr.mxu0 0.0
      %857 = vmatpush2.msra.mxu0 0.0
      %858 = vmatprep.subr.mxu0 0.0
      %859 = vmatpush2.msra.mxu0 0.0
      %860 = vmatprep.subr.mxu0 0.0
      %861 = vmatpush2.msra.mxu0 0.0
      %862 = vmatprep.subr.mxu0 0.0
      %863 = vmatpush2.msra.mxu0 0.0
      %864 = vmatprep.subr.mxu0 0.0
      %865 = vmatpush2.msra.mxu0 0.0
      %866 = vmatprep.subr.mxu0 0.0
      %867 = vmatpush2.msra.mxu0 0.0
      %868 = vmatprep.subr.mxu0 0.0
      %869 = vmatpush2.msra.mxu0 0.0
      %870 = vmatprep.subr.mxu0 0.0
      %871 = vmatpush2.msra.mxu0 0.0
      %872 = vmatprep.subr.mxu0 0.0
      %873 = vmatpush2.msra.mxu0 0.0
      %874 = vmatprep.subr.mxu0 0.0
      %875 = vmatpush2.msra.mxu0 0.0
      %876 = vmatprep.subr.mxu0 0.0
      %877 = vmatpush2.msra.mxu0 0.0
      %878 = vmatprep.subr.mxu0 0.0
      %879 = vmatpush2.msra.mxu0 0.0
      %880 = vmatprep.mubr.f32.mxu0 0.0
      %881 = vmatmul.mubr.f32.gmra.mxu0 %v814
      %v882 = vpop.f32.mrf.mxu0
      %v883 = vadd.f32 %v813, %v882
      %v884 = vpop.f32.mrf.mxu0
      %885 = vdwg.mxu0
      %v886 = vxor.u32 %v883, 2147483648
      %v887 = vmul.f32 %v886, 1.442695
      %v888 = vpow.pop %v887
      %v889 = vadd.f32 %v888, 1.0
      %v890 = vrcp.pop %v889
      %v891 = vmul.f32 1.0, %v890
      %v892 = vtanh.pop %v883
      %v893 = vmul.f32 %v891, %v800
      %895 = vrot.lane.b32.xlu0 %v892, 32
      %v896 = vpop.permute.xlu0 %895
      %v898 = vmul.f32 %v891, %v896
      %900 = vrot.lane.b32.xlu0 %v898, 32
      %v901 = vpop.permute.xlu0 %900
      %v903 = vadd.f32 %v893, %v901
      %v904 = vtanh.pop %v903
      %906 = vrot.lane.b32.xlu0 %v904, 32
      %v907 = vpop.permute.xlu0 %906
      %v909 = vmul.f32 %v891, %v907
      %s910 = scalar_select %p810, 1, 0
      %v911 = vstv %s910
      %vm912 = vcmp.eq.s32.totalorder %v911, 1
      %v913 = vsel %vm912, %v903, %v800
      %v914 = vsel %vm912, %v909, %v801
      %916 = vrot.lane.b32.xlu0 %v914, 64
      %v917 = vpop.permute.xlu0 %916
      %s919 = scalar_lea.vmem %s312, %s811
      %920 = vst.msk [vmem:[%s919] sm:$0x3] %vm465, %v917
      %s921 = smul.u32 %s20, 4294967293
      %s922 = sadd.s32 %s921, 5
      %s923 = sadd.s32 %s341, %s922
      %p924 = scmp.lt.s32.totalorder %s923, 8
      %s925 = smul.u32 %s922, 2
      %s926 = scalar_lea.vmem %s289, %s925
      %v927 = vld [vmem:[%s926] sm:$0x3]
      %v928 = vsel %vm350, %v917, 0
      %930 = vmatprep.subr.mxu0 0.0
      %931 = vmatpush1.msra.mxu0 0.0
      %932 = vmatprep.subr.mxu0 0.0
      %933 = vmatpush1.msra.mxu0 0.0
      %934 = vmatprep.subr.mxu0 0.0
      %935 = vmatpush1.msra.mxu0 0.0
      %936 = vmatprep.subr.mxu0 0.0
      %937 = vmatpush1.msra.mxu0 0.0
      %938 = vmatprep.subr.mxu0 0.0
      %939 = vmatpush1.msra.mxu0 0.0
      %940 = vmatprep.subr.mxu0 0.0
      %941 = vmatpush1.msra.mxu0 0.0
      %942 = vmatprep.subr.mxu0 0.0
      %943 = vmatpush1.msra.mxu0 0.0
      %944 = vmatprep.subr.mxu0 0.0
      %945 = vmatpush1.msra.mxu0 0.0
      %946 = vmatprep.subr.mxu0 0.0
      %947 = vmatpush1.msra.mxu0 0.0
      %948 = vmatprep.subr.mxu0 0.0
      %949 = vmatpush1.msra.mxu0 0.0
      %950 = vmatprep.subr.mxu0 0.0
      %951 = vmatpush1.msra.mxu0 0.0
      %952 = vmatprep.subr.mxu0 0.0
      %953 = vmatpush1.msra.mxu0 0.0
      %954 = vmatprep.subr.mxu0 0.0
      %955 = vmatpush1.msra.mxu0 %v336
      %956 = vmatprep.subr.mxu0 0.0
      %957 = vmatpush1.msra.mxu0 %v335
      %958 = vmatprep.subr.mxu0 0.0
      %959 = vmatpush1.msra.mxu0 %v334
      %960 = vmatprep.subr.mxu0 0.0
      %961 = vmatpush1.msra.mxu0 %v333
      %962 = vmatprep.subr.mxu0 0.0
      %963 = vmatpush2.msra.mxu0 0.0
      %964 = vmatprep.subr.mxu0 0.0
      %965 = vmatpush2.msra.mxu0 0.0
      %966 = vmatprep.subr.mxu0 0.0
      %967 = vmatpush2.msra.mxu0 0.0
      %968 = vmatprep.subr.mxu0 0.0
      %969 = vmatpush2.msra.mxu0 0.0
      %970 = vmatprep.subr.mxu0 0.0
      %971 = vmatpush2.msra.mxu0 0.0
      %972 = vmatprep.subr.mxu0 0.0
      %973 = vmatpush2.msra.mxu0 0.0
      %974 = vmatprep.subr.mxu0 0.0
      %975 = vmatpush2.msra.mxu0 0.0
      %976 = vmatprep.subr.mxu0 0.0
      %977 = vmatpush2.msra.mxu0 0.0
      %978 = vmatprep.subr.mxu0 0.0
      %979 = vmatpush2.msra.mxu0 0.0
      %980 = vmatprep.subr.mxu0 0.0
      %981 = vmatpush2.msra.mxu0 0.0
      %982 = vmatprep.subr.mxu0 0.0
      %983 = vmatpush2.msra.mxu0 0.0
      %984 = vmatprep.subr.mxu0 0.0
      %985 = vmatpush2.msra.mxu0 0.0
      %986 = vmatprep.subr.mxu0 0.0
      %987 = vmatpush2.msra.mxu0 0.0
      %988 = vmatprep.subr.mxu0 0.0
      %989 = vmatpush2.msra.mxu0 0.0
      %990 = vmatprep.subr.mxu0 0.0
      %991 = vmatpush2.msra.mxu0 0.0
      %992 = vmatprep.subr.mxu0 0.0
      %993 = vmatpush2.msra.mxu0 0.0
      %994 = vmatprep.mubr.f32.mxu0 0.0
      %995 = vmatmul.mubr.f32.gmra.mxu0 %v928
      %v996 = vpop.f32.mrf.mxu0
      %v997 = vadd.f32 %v927, %v996
      %v998 = vpop.f32.mrf.mxu0
      %999 = vdwg.mxu0
      %v1000 = vxor.u32 %v997, 2147483648
      %v1001 = vmul.f32 %v1000, 1.442695
      %v1002 = vpow.pop %v1001
      %v1003 = vadd.f32 %v1002, 1.0
      %v1004 = vrcp.pop %v1003
      %v1005 = vmul.f32 1.0, %v1004
      %v1006 = vtanh.pop %v997
      %v1007 = vmul.f32 %v1005, %v913
      %1009 = vrot.lane.b32.xlu0 %v1006, 32
      %v1010 = vpop.permute.xlu0 %1009
      %v1012 = vmul.f32 %v1005, %v1010
      %1014 = vrot.lane.b32.xlu0 %v1012, 32
      %v1015 = vpop.permute.xlu0 %1014
      %v1017 = vadd.f32 %v1007, %v1015
      %v1018 = vtanh.pop %v1017
      %1020 = vrot.lane.b32.xlu0 %v1018, 32
      %v1021 = vpop.permute.xlu0 %1020
      %v1023 = vmul.f32 %v1005, %v1021
      %s1024 = scalar_select %p924, 1, 0
      %v1025 = vstv %s1024
      %vm1026 = vcmp.eq.s32.totalorder %v1025, 1
      %v1027 = vsel %vm1026, %v1017, %v913
      %v1028 = vsel %vm1026, %v1023, %v914
      %1030 = vrot.lane.b32.xlu0 %v1028, 64
      %v1031 = vpop.permute.xlu0 %1030
      %s1033 = scalar_lea.vmem %s312, %s925
      %1034 = vst.msk [vmem:[%s1033] sm:$0x3] %vm465, %v1031
      %s1035 = smul.u32 %s20, 4294967291
      %s1036 = sadd.s32 %s1035, 6
      %s1037 = sadd.s32 %s341, %s1036
      %p1038 = scmp.lt.s32.totalorder %s1037, 8
      %s1039 = smul.u32 %s1036, 2
      %s1040 = scalar_lea.vmem %s289, %s1039
      %v1041 = vld [vmem:[%s1040] sm:$0x3]
      %v1042 = vsel %vm350, %v1031, 0
      %1044 = vmatprep.subr.mxu0 0.0
      %1045 = vmatpush1.msra.mxu0 0.0
      %1046 = vmatprep.subr.mxu0 0.0
      %1047 = vmatpush1.msra.mxu0 0.0
      %1048 = vmatprep.subr.mxu0 0.0
      %1049 = vmatpush1.msra.mxu0 0.0
      %1050 = vmatprep.subr.mxu0 0.0
      %1051 = vmatpush1.msra.mxu0 0.0
      %1052 = vmatprep.subr.mxu0 0.0
      %1053 = vmatpush1.msra.mxu0 0.0
      %1054 = vmatprep.subr.mxu0 0.0
      %1055 = vmatpush1.msra.mxu0 0.0
      %1056 = vmatprep.subr.mxu0 0.0
      %1057 = vmatpush1.msra.mxu0 0.0
      %1058 = vmatprep.subr.mxu0 0.0
      %1059 = vmatpush1.msra.mxu0 0.0
      %1060 = vmatprep.subr.mxu0 0.0
      %1061 = vmatpush1.msra.mxu0 0.0
      %1062 = vmatprep.subr.mxu0 0.0
      %1063 = vmatpush1.msra.mxu0 0.0
      %1064 = vmatprep.subr.mxu0 0.0
      %1065 = vmatpush1.msra.mxu0 0.0
      %1066 = vmatprep.subr.mxu0 0.0
      %1067 = vmatpush1.msra.mxu0 0.0
      %1068 = vmatprep.subr.mxu0 0.0
      %1069 = vmatpush1.msra.mxu0 %v336
      %1070 = vmatprep.subr.mxu0 0.0
      %1071 = vmatpush1.msra.mxu0 %v335
      %1072 = vmatprep.subr.mxu0 0.0
      %1073 = vmatpush1.msra.mxu0 %v334
      %1074 = vmatprep.subr.mxu0 0.0
      %1075 = vmatpush1.msra.mxu0 %v333
      %1076 = vmatprep.subr.mxu0 0.0
      %1077 = vmatpush2.msra.mxu0 0.0
      %1078 = vmatprep.subr.mxu0 0.0
      %1079 = vmatpush2.msra.mxu0 0.0
      %1080 = vmatprep.subr.mxu0 0.0
      %1081 = vmatpush2.msra.mxu0 0.0
      %1082 = vmatprep.subr.mxu0 0.0
      %1083 = vmatpush2.msra.mxu0 0.0
      %1084 = vmatprep.subr.mxu0 0.0
      %1085 = vmatpush2.msra.mxu0 0.0
      %1086 = vmatprep.subr.mxu0 0.0
      %1087 = vmatpush2.msra.mxu0 0.0
      %1088 = vmatprep.subr.mxu0 0.0
      %1089 = vmatpush2.msra.mxu0 0.0
      %1090 = vmatprep.subr.mxu0 0.0
      %1091 = vmatpush2.msra.mxu0 0.0
      %1092 = vmatprep.subr.mxu0 0.0
      %1093 = vmatpush2.msra.mxu0 0.0
      %1094 = vmatprep.subr.mxu0 0.0
      %1095 = vmatpush2.msra.mxu0 0.0
      %1096 = vmatprep.subr.mxu0 0.0
      %1097 = vmatpush2.msra.mxu0 0.0
      %1098 = vmatprep.subr.mxu0 0.0
      %1099 = vmatpush2.msra.mxu0 0.0
      %1100 = vmatprep.subr.mxu0 0.0
      %1101 = vmatpush2.msra.mxu0 0.0
      %1102 = vmatprep.subr.mxu0 0.0
      %1103 = vmatpush2.msra.mxu0 0.0
      %1104 = vmatprep.subr.mxu0 0.0
      %1105 = vmatpush2.msra.mxu0 0.0
      %1106 = vmatprep.subr.mxu0 0.0
      %1107 = vmatpush2.msra.mxu0 0.0
      %1108 = vmatprep.mubr.f32.mxu0 0.0
      %1109 = vmatmul.mubr.f32.gmra.mxu0 %v1042
      %v1110 = vpop.f32.mrf.mxu0
      %v1111 = vadd.f32 %v1041, %v1110
      %v1112 = vpop.f32.mrf.mxu0
      %1113 = vdwg.mxu0
      %v1114 = vxor.u32 %v1111, 2147483648
      %v1115 = vmul.f32 %v1114, 1.442695
      %v1116 = vpow.pop %v1115
      %v1117 = vadd.f32 %v1116, 1.0
      %v1118 = vrcp.pop %v1117
      %v1119 = vmul.f32 1.0, %v1118
      %v1120 = vtanh.pop %v1111
      %v1121 = vmul.f32 %v1119, %v1027
      %1123 = vrot.lane.b32.xlu0 %v1120, 32
      %v1124 = vpop.permute.xlu0 %1123
      %v1126 = vmul.f32 %v1119, %v1124
      %1128 = vrot.lane.b32.xlu0 %v1126, 32
      %v1129 = vpop.permute.xlu0 %1128
      %v1131 = vadd.f32 %v1121, %v1129
      %v1132 = vtanh.pop %v1131
      %1134 = vrot.lane.b32.xlu0 %v1132, 32
      %v1135 = vpop.permute.xlu0 %1134
      %v1137 = vmul.f32 %v1119, %v1135
      %s1138 = scalar_select %p1038, 1, 0
      %v1139 = vstv %s1138
      %vm1140 = vcmp.eq.s32.totalorder %v1139, 1
      %v1141 = vsel %vm1140, %v1131, %v1027
      %v1142 = vsel %vm1140, %v1137, %v1028
      %1144 = vrot.lane.b32.xlu0 %v1142, 64
      %v1145 = vpop.permute.xlu0 %1144
      %s1147 = scalar_lea.vmem %s312, %s1039
      %1148 = vst.msk [vmem:[%s1147] sm:$0x3] %vm465, %v1145
      %s1149 = smul.u32 %s20, 4294967289
      %s1150 = sadd.s32 %s1149, 7
      %s1151 = sadd.s32 %s341, %s1150
      %p1152 = scmp.lt.s32.totalorder %s1151, 8
      %s1153 = smul.u32 %s1150, 2
      %s1154 = scalar_lea.vmem %s289, %s1153
      %v1155 = vld [vmem:[%s1154] sm:$0x3]
      %v1156 = vsel %vm350, %v1145, 0
      %1158 = vmatprep.subr.mxu0 0.0
      %1159 = vmatpush1.msra.mxu0 0.0
      %1160 = vmatprep.subr.mxu0 0.0
      %1161 = vmatpush1.msra.mxu0 0.0
      %1162 = vmatprep.subr.mxu0 0.0
      %1163 = vmatpush1.msra.mxu0 0.0
      %1164 = vmatprep.subr.mxu0 0.0
      %1165 = vmatpush1.msra.mxu0 0.0
      %1166 = vmatprep.subr.mxu0 0.0
      %1167 = vmatpush1.msra.mxu0 0.0
      %1168 = vmatprep.subr.mxu0 0.0
      %1169 = vmatpush1.msra.mxu0 0.0
      %1170 = vmatprep.subr.mxu0 0.0
      %1171 = vmatpush1.msra.mxu0 0.0
      %1172 = vmatprep.subr.mxu0 0.0
      %1173 = vmatpush1.msra.mxu0 0.0
      %1174 = vmatprep.subr.mxu0 0.0
      %1175 = vmatpush1.msra.mxu0 0.0
      %1176 = vmatprep.subr.mxu0 0.0
      %1177 = vmatpush1.msra.mxu0 0.0
      %1178 = vmatprep.subr.mxu0 0.0
      %1179 = vmatpush1.msra.mxu0 0.0
      %1180 = vmatprep.subr.mxu0 0.0
      %1181 = vmatpush1.msra.mxu0 0.0
      %1182 = vmatprep.subr.mxu0 0.0
      %1183 = vmatpush1.msra.mxu0 %v336
      %1184 = vmatprep.subr.mxu0 0.0
      %1185 = vmatpush1.msra.mxu0 %v335
      %1186 = vmatprep.subr.mxu0 0.0
      %1187 = vmatpush1.msra.mxu0 %v334
      %1188 = vmatprep.subr.mxu0 0.0
      %1189 = vmatpush1.msra.mxu0 %v333
      %1190 = vmatprep.subr.mxu0 0.0
      %1191 = vmatpush2.msra.mxu0 0.0
      %1192 = vmatprep.subr.mxu0 0.0
      %1193 = vmatpush2.msra.mxu0 0.0
      %1194 = vmatprep.subr.mxu0 0.0
      %1195 = vmatpush2.msra.mxu0 0.0
      %1196 = vmatprep.subr.mxu0 0.0
      %1197 = vmatpush2.msra.mxu0 0.0
      %1198 = vmatprep.subr.mxu0 0.0
      %1199 = vmatpush2.msra.mxu0 0.0
      %1200 = vmatprep.subr.mxu0 0.0
      %1201 = vmatpush2.msra.mxu0 0.0
      %1202 = vmatprep.subr.mxu0 0.0
      %1203 = vmatpush2.msra.mxu0 0.0
      %1204 = vmatprep.subr.mxu0 0.0
      %1205 = vmatpush2.msra.mxu0 0.0
      %1206 = vmatprep.subr.mxu0 0.0
      %1207 = vmatpush2.msra.mxu0 0.0
      %1208 = vmatprep.subr.mxu0 0.0
      %1209 = vmatpush2.msra.mxu0 0.0
      %1210 = vmatprep.subr.mxu0 0.0
      %1211 = vmatpush2.msra.mxu0 0.0
      %1212 = vmatprep.subr.mxu0 0.0
      %1213 = vmatpush2.msra.mxu0 0.0
      %1214 = vmatprep.subr.mxu0 0.0
      %1215 = vmatpush2.msra.mxu0 0.0
      %1216 = vmatprep.subr.mxu0 0.0
      %1217 = vmatpush2.msra.mxu0 0.0
      %1218 = vmatprep.subr.mxu0 0.0
      %1219 = vmatpush2.msra.mxu0 0.0
      %1220 = vmatprep.subr.mxu0 0.0
      %1221 = vmatpush2.msra.mxu0 0.0
      %1222 = vmatprep.mubr.f32.mxu0 0.0
      %1223 = vmatmul.mubr.f32.gmra.mxu0 %v1156
      %v1224 = vpop.f32.mrf.mxu0
      %v1225 = vadd.f32 %v1155, %v1224
      %v1226 = vpop.f32.mrf.mxu0
      %1227 = vdwg.mxu0
      %v1228 = vxor.u32 %v1225, 2147483648
      %v1229 = vmul.f32 %v1228, 1.442695
      %v1230 = vpow.pop %v1229
      %v1231 = vadd.f32 %v1230, 1.0
      %v1232 = vrcp.pop %v1231
      %v1233 = vmul.f32 1.0, %v1232
      %v1234 = vtanh.pop %v1225
      %v1235 = vmul.f32 %v1233, %v1141
      %1237 = vrot.lane.b32.xlu0 %v1234, 32
      %v1238 = vpop.permute.xlu0 %1237
      %v1240 = vmul.f32 %v1233, %v1238
      %1242 = vrot.lane.b32.xlu0 %v1240, 32
      %v1243 = vpop.permute.xlu0 %1242
      %v1245 = vadd.f32 %v1235, %v1243
      %v1246 = vtanh.pop %v1245
      %1248 = vrot.lane.b32.xlu0 %v1246, 32
      %v1249 = vpop.permute.xlu0 %1248
      %v1251 = vmul.f32 %v1233, %v1249
      %s1252 = scalar_select %p1152, 1, 0
      %v1253 = vstv %s1252
      %vm1254 = vcmp.eq.s32.totalorder %v1253, 1
      %v1255 = vsel %vm1254, %v1245, %v1141
      %v1256 = vsel %vm1254, %v1251, %v1142
      %1258 = vrot.lane.b32.xlu0 %v1256, 64
      %v1259 = vpop.permute.xlu0 %1258
      %s1261 = scalar_lea.vmem %s312, %s1153
      %1262 = vst.msk [vmem:[%s1261] sm:$0x3] %vm465, %v1259
      %1263 = vst.msk [vmem:[%s321] sm:$0x3] %vm465, %v1259
      %1265 = vrot.lane.b32.xlu0 %v1255, 96
      %v1266 = vpop.permute.xlu0 %1265
      %1268 = vst.msk [vmem:[%s325] sm:$0x3] %vm465, %v1266
      %s1269 = smul.u32 %s21, 2
      %s1270 = ssub.s32 0, %s1269
      %s1271 = smul.u32 %s20, %s1270
      %s1272 = sadd.s32 %s21, %s1271
      %s1273 = smul.u32 8, %s1272
      %p1274 = scmp.lt.s32.totalorder %s20, 1
      %s1275 = scalar_select %p1274, %s20, 1
      %p1276 = scmp.lt.s32.totalorder %s1273, 7
      %s1277 = scalar_select %p1276, %s1273, 7
      %s1278 = smul.addr %s1275, 8
      %s1279 = sadd.s32 %s1277, %s1278
      %s1280 = smul.addr %s1279, 2
      %s1281 = scalar_lea.vmem %s2, %s1280
      %p1282 = scmp.lt.s32.totalorder %s20, 1
      %s1283 = scalar_select %p1282, %s20, 1
      %s1284 = smul.addr %s1283, 2
      %s1285 = scalar_lea.vmem %s3, %s1284
      %p1286 = scmp.lt.s32.totalorder %s20, 1
      %s1287 = scalar_select %p1286, %s20, 1
      %s1288 = smul.addr %s1287, 2
      %s1289 = scalar_lea.vmem %s4, %s1288
      // Predicated region
      $region33: #{rnn_layer_forward.2} parent=27 // pred_check
        %p1290 = pneg %p118
      $region34: #{rnn_layer_forward.2} parent=27 // pred_check_branch
        %1292 = sbr.rel (%p1290) target = $region36
      $region35: #{rnn_layer_forward.2} parent=27 // pred_region
        %s1293 = smul.u32 %s21, 2
        %s1294 = ssub.s32 0, %s1293
        %s1295 = smul.u32 %s20, %s1294
        %s1296 = sadd.s32 %s21, %s1295
        %s1297 = smul.u32 8, %s1296
      $region36: #{rnn_layer_forward.2} parent=27 // pred_fallthru
        _
      // Predicated region
      $region37: #{rnn_layer_forward.2} parent=27 // pred_check
        %p1298 = pneg %p144
      $region38: #{rnn_layer_forward.2} parent=27 // pred_check_branch
        %1300 = sbr.rel (%p1298) target = $region40
      $region39: #{rnn_layer_forward.2} parent=27 // pred_region
        _
      $region40: #{rnn_layer_forward.2} parent=27 // pred_fallthru
        _
      // Predicated region
      $region41: #{rnn_layer_forward.2} parent=27 // pred_check
        %p1301 = pneg %p170
      $region42: #{rnn_layer_forward.2} parent=27 // pred_check_branch
        %1303 = sbr.rel (%p1301) target = $region44
      $region43: #{rnn_layer_forward.2} parent=27 // pred_region
        _
      $region44: #{rnn_layer_forward.2} parent=27 // pred_fallthru
        _
    $region28: #{rnn_layer_forward.2} parent=5 // pred_fallthru
      _
    %p1304 = scmp.le.s32.totalorder 2, %s11
    // Predicated region
    $region45: #{rnn_layer_forward.2} parent=5 // pred_check
      %p1305 = pneg %p1304
    $region46: #{rnn_layer_forward.2} parent=5 // pred_check_branch
      %1307 = sbr.rel (%p1305) target = $region48
    $region47: #{rnn_layer_forward.2} parent=5 // pred_region
      %s1308 = ssub.s32 %s11, 2
      // Predicated region
      $region49: #{rnn_layer_forward.2} parent=47 // pred_check
        %p1309 = pneg %p124
      $region50: #{rnn_layer_forward.2} parent=47 // pred_check_branch
        %1311 = sbr.rel (%p1309) target = $region52
      $region51: #{rnn_layer_forward.2} parent=47 // pred_region
        %s1312 = smul.u32 %s23, 2
        %s1313 = ssub.s32 0, %s1312
        %s1314 = smul.u32 %s22, %s1313
        %s1315 = sadd.s32 %s23, %s1314
        %s1316 = smul.u32 8, %s1315
        %p1317 = scmp.lt.s32.totalorder %s22, 1
        %s1318 = scalar_select %p1317, %s22, 1
        %p1319 = scmp.lt.s32.totalorder %s1316, 7
        %s1320 = scalar_select %p1319, %s1316, 7
        %s1321 = smul.addr %s1318, 8
        %s1322 = sadd.s32 %s1320, %s1321
        %s1323 = smul.addr %s1322, 2
        %s1324 = scalar_lea.vmem %s2, %s1323
      $region52: #{rnn_layer_forward.2} parent=47 // pred_fallthru
        _
      // Predicated region
      $region53: #{rnn_layer_forward.2} parent=47 // pred_check
        %p1325 = pneg %p150
      $region54: #{rnn_layer_forward.2} parent=47 // pred_check_branch
        %1327 = sbr.rel (%p1325) target = $region56
      $region55: #{rnn_layer_forward.2} parent=47 // pred_region
        %p1328 = scmp.lt.s32.totalorder %s22, 1
        %s1329 = scalar_select %p1328, %s22, 1
        %s1330 = smul.addr %s1329, 2
        %s1331 = scalar_lea.vmem %s3, %s1330
      $region56: #{rnn_layer_forward.2} parent=47 // pred_fallthru
        _
      // Predicated region
      $region57: #{rnn_layer_forward.2} parent=47 // pred_check
        %p1332 = pneg %p176
      $region58: #{rnn_layer_forward.2} parent=47 // pred_check_branch
        %1334 = sbr.rel (%p1332) target = $region60
      $region59: #{rnn_layer_forward.2} parent=47 // pred_region
        %p1335 = scmp.lt.s32.totalorder %s22, 1
        %s1336 = scalar_select %p1335, %s22, 1
        %s1337 = smul.addr %s1336, 2
        %s1338 = scalar_lea.vmem %s4, %s1337
      $region60: #{rnn_layer_forward.2} parent=47 // pred_fallthru
        _
    $region48: #{rnn_layer_forward.2} parent=5 // pred_fallthru
      _
  $region6: #{rnn_layer_forward.2} parent=0 // loop_footer
    %s15 = sadd.s32 1, %s11
  $region7: #{rnn_layer_forward.2} parent=0 // loop_footer_branch
    %10 = sbr.rel target = $region3
  $region8: #{rnn_layer_forward.2} parent=0 // loop_exit
    _

</llo_original>
